<compile_context>
chip_gen: v7x
topology: tpu7x:2x2x1
jax: 0.10.0
libtpu: 0.0.40
codegen_flags: <defaults>
</compile_context>

<pallas_src>
import jax
import jax.numpy as jnp
from jax import lax
from jax.experimental import pallas as pl
from jax.experimental.pallas import tpu as pltpu

GAMMA0 = 0.01
RHO0 = 1.0
TAU0 = 10.0


def _round_up(v, mult):
    return (v + mult - 1) // mult * mult


def _primal_dual_kernel(tau_ref, gamma_ref, rho_ref,
                        x_ref, yk_ref, ykm1_ref, z_ref, h_ref,
                        xo_ref, yo_ref):
    # ReLU'd learned scalar step sizes (SMEM scalars, scalar unit).
    tau = jnp.maximum(tau_ref[0], 0.0)
    gamma = jnp.maximum(gamma_ref[0], 0.0)
    rho = jnp.maximum(rho_ref[0], 0.0)

    # prox_dual as two scalar coefficients (no per-element divide):
    #   y = rho*(yk + gamma*Hx - gamma*z)/(rho+gamma) = c1*yk + c2*(Hx - z)
    # NOTE: like the PyTorch layer, this is 0/0 if both rho and gamma ReLU to 0.
    c1 = rho / (rho + gamma)
    c2 = c1 * gamma

    H = h_ref[...]          # (TB, m, n)
    x = x_ref[...]          # (TB, 1, n)
    yk = yk_ref[...]        # (TB, 1, m)
    ykm1 = ykm1_ref[...]    # (TB, 1, m)
    z = z_ref[...]          # (TB, 1, m)

    # y_tilde = 2*yk - ykm1
    y_tilde = (2.0 * yk - ykm1).astype(H.dtype)

    # bpk_raw[b] = H[b]^T @ y_tilde[b], produced as a row:
    #   (TB,1,m) x (TB,m,n) -> (TB,1,n).  Both operands are MXU-native
    #   (lhs contracts its lane dim, rhs contracts its sublane dim): no transposes.
    bpk_raw = lax.dot_general(
        y_tilde, H, (((2,), (1,)), ((0,), (0,))),
        preferred_element_type=jnp.float32)

    # x = prox_primal(x - tau * H^T y_tilde, tau)   (ReLU assumed, see TODO above)
    x_new = jnp.maximum(x - tau * bpk_raw, 0.0)
    xo_ref[...] = x_new.astype(xo_ref.dtype)

    # bdk_raw[b] = H[b] @ x_new[b] in native orientation: H is the LHS contracting
    # its last (lane) dim, so the full (m, n) H tile is never transposed.  Only the
    # small (1, n) x_new row gets re-laid-out internally.  Result is a column
    # (TB, m, 1); lay it out as a row with a tiny minor-dims transpose.
    bdk_col = lax.dot_general(
        H, x_new.astype(H.dtype), (((2,), (2,)), ((0,), (0,))),
        preferred_element_type=jnp.float32)
    bdk_raw = jnp.swapaxes(bdk_col, 1, 2)          # (TB, 1, m)

    # y = prox_dual(yk + gamma*Hx, gamma, z, rho)   (see TODO above)
    yo_ref[...] = (c1 * yk + c2 * (bdk_raw - z)).astype(yo_ref.dtype)


def primal_dual_layer(x, yk, ykm1, z, H, tau, gamma, rho,
                      *, target_block_bytes=8 * 1024 * 1024, h_dtype=None):
    """x: (B, n); yk/ykm1/z: (B, m); H: (B, m, n). Returns (x_new (B,n), y_new (B,m))."""
    B, n = x.shape
    m = yk.shape[1]
    assert yk.shape == (B, m) and ykm1.shape == (B, m) and z.shape == (B, m)
    assert H.shape == (B, m, n)

    f32 = jnp.float32
    x = x.astype(f32)
    yk = yk.astype(f32)
    ykm1 = ykm1.astype(f32)
    z = z.astype(f32)
    if h_dtype is not None:
        # Optional bandwidth saver (feedback #8): stream H in bf16, accumulate in f32.
        H = H.astype(h_dtype)
    tau = jnp.asarray(tau, f32).reshape(1)
    gamma = jnp.asarray(gamma, f32).reshape(1)
    rho = jnp.asarray(rho, f32).reshape(1)

    # ---- choose the batch tile TB (sized from per-buffer VMEM) --------------------
    # Per batch element inside one pipeline buffer:
    #   H tile              : round_up(m,8) * round_up(n,128) * itemsize
    #   6 row-vector tiles  : each (1, k) pads to an (8, round_up(k,128)) f32 tile
    h_item = jnp.dtype(H.dtype).itemsize
    h_tile = _round_up(m, 8) * _round_up(n, 128) * h_item
    vec_tile = 8 * 4 * (2 * _round_up(n, 128) + 4 * _round_up(m, 128))
    per_elem = h_tile + vec_tile
    tb = max(8, min(256, int(target_block_bytes // per_elem)))
    tb = max(8, (tb // 8) * 8)
    tb = min(tb, _round_up(B, 8))
    # Keep >= 2 grid steps when the batch allows it, so the "parallel" axis can be
    # sharded across both TensorCores on v7x and the DMA pipeline has overlap.
    if pl.cdiv(B, tb) < 2 and B >= 16:
        tb = max(8, (_round_up(B, 8) // 2 // 8) * 8)
    grid = pl.cdiv(B, tb)

    # Free metadata reshapes: each batch row becomes the natural (1, k) MXU operand.
    x3 = x.reshape(B, 1, n)
    yk3 = yk.reshape(B, 1, m)
    ykm13 = ykm1.reshape(B, 1, m)
    z3 = z.reshape(B, 1, m)

    vec_n_spec = pl.BlockSpec((tb, 1, n), lambda g: (g, 0, 0))
    vec_m_spec = pl.BlockSpec((tb, 1, m), lambda g: (g, 0, 0))
    h_spec = pl.BlockSpec((tb, m, n), lambda g: (g, 0, 0))
    smem_spec = pl.BlockSpec(memory_space=pltpu.SMEM)

    x_out, y_out = pl.pallas_call(
        _primal_dual_kernel,
        out_shape=(
            jax.ShapeDtypeStruct((B, 1, n), f32),
            jax.ShapeDtypeStruct((B, 1, m), f32),
        ),
        grid_spec=pltpu.PrefetchScalarGridSpec(
            num_scalar_prefetch=0,
            grid=(grid,),
            in_specs=[smem_spec, smem_spec, smem_spec,
                      vec_n_spec, vec_m_spec, vec_m_spec, vec_m_spec, h_spec],
            out_specs=(vec_n_spec, vec_m_spec),
        ),
        compiler_params=pltpu.CompilerParams(
            dimension_semantics=("parallel",),
            # TB is sized so double-buffered blocks stay well under v7x's 64 MiB
            # physical VMEM; the explicit limit just lifts the scoped default.
            vmem_limit_bytes=64 * 1024 * 1024,
        ),
    )(tau, gamma, rho, x3, yk3, ykm13, z3, H)

    return x_out.reshape(B, n), y_out.reshape(B, m)


def _reference(x, yk, ykm1, z, H, tau, gamma, rho):
    """Pure-JAX reference mirroring the PyTorch forward (torch.Tensor H branch)."""
    t = jnp.maximum(tau[0], 0.0)
    g = jnp.maximum(gamma[0], 0.0)
    r = jnp.maximum(rho[0], 0.0)
    y_tilde = 2.0 * yk - ykm1
    bpk = -t * jnp.einsum('bmn,bm->bn', H, y_tilde)
    x_new = jnp.maximum(x + bpk, 0.0)
    bdk = g * jnp.einsum('bmn,bn->bm', H, x_new)
    y_new = r * (yk + bdk - g * z) / (r + g)
    return x_new, y_new


if __name__ == "__main__":
    B, m, n = 16, 20, 100
    init_factor = 1.0

    key = jax.random.PRNGKey(0)
    k_x, k_yk, k_ykm1, k_z, k_H = jax.random.split(key, 5)
    x = jax.random.normal(k_x, (B, n), dtype=jnp.float32)
    yk = jax.random.normal(k_yk, (B, m), dtype=jnp.float32)
    ykm1 = jax.random.normal(k_ykm1, (B, m), dtype=jnp.float32)
    z = jax.random.normal(k_z, (B, m), dtype=jnp.float32)
    H = jax.random.normal(k_H, (B, m, n), dtype=jnp.float32)

    # Deterministic parameter init (matches nn.Parameter([tau*f]) etc.)
    tau_p = jnp.array([TAU0 * init_factor], dtype=jnp.float32)
    gamma_p = jnp.array([GAMMA0 * init_factor], dtype=jnp.float32)
    rho_p = jnp.array([RHO0 * init_factor], dtype=jnp.float32)

    x_new, y_new = primal_dual_layer(x, yk, ykm1, z, H, tau_p, gamma_p, rho_p)
    jax.block_until_ready((x_new, y_new))

    x_ref, y_ref = _reference(x, yk, ykm1, z, H, tau_p, gamma_p, rho_p)
    assert x_new.shape == (B, n) and y_new.shape == (B, m)
    assert jnp.allclose(x_new, x_ref, atol=1e-3, rtol=1e-3), \
        float(jnp.max(jnp.abs(x_new - x_ref)))
    assert jnp.allclose(y_new, y_ref, atol=1e-3, rtol=1e-3), \
        float(jnp.max(jnp.abs(y_new - y_ref)))

    print("KERNEL_OK")
</pallas_src>

<mosaic_0001>
module attributes {stable_mosaic.version = 11 : i64} {
  func.func @_primal_dual_kernel(%arg0: i32, %arg1: memref<1xf32, #tpu.memory_space<smem>>, %arg2: memref<1xf32, #tpu.memory_space<smem>>, %arg3: memref<1xf32, #tpu.memory_space<smem>>, %arg4: memref<8x1x100xf32, #tpu.memory_space<vmem>>, %arg5: memref<8x1x20xf32, #tpu.memory_space<vmem>>, %arg6: memref<8x1x20xf32, #tpu.memory_space<vmem>>, %arg7: memref<8x1x20xf32, #tpu.memory_space<vmem>>, %arg8: memref<8x20x100xf32, #tpu.memory_space<vmem>>, %arg9: memref<8x1x100xf32, #tpu.memory_space<vmem>>, %arg10: memref<8x1x20xf32, #tpu.memory_space<vmem>>) attributes {dimension_semantics = [#tpu.dimension_semantics<parallel>], iteration_bounds = array<i64: 2>, scalar_prefetch = 0 : i64, scratch_operands = 0 : i64, tpu.core_type = #tpu.core_type<tc>, window_params = [{transform_indices = @transform_0, window_bounds = array<i64: 1>}, {transform_indices = @transform_1, window_bounds = array<i64: 1>}, {transform_indices = @transform_2, window_bounds = array<i64: 1>}, {transform_indices = @transform_3, window_bounds = array<i64: 8, 1, 100>}, {transform_indices = @transform_4, window_bounds = array<i64: 8, 1, 20>}, {transform_indices = @transform_5, window_bounds = array<i64: 8, 1, 20>}, {transform_indices = @transform_6, window_bounds = array<i64: 8, 1, 20>}, {transform_indices = @transform_7, window_bounds = array<i64: 8, 20, 100>}, {transform_indices = @transform_8, window_bounds = array<i64: 8, 1, 100>}, {transform_indices = @transform_9, window_bounds = array<i64: 8, 1, 20>}]} {
    %c0 = arith.constant 0 : index
    %0 = memref.load %arg1[%c0] : memref<1xf32, #tpu.memory_space<smem>>
    %cst = arith.constant 0.000000e+00 : f32
    %1 = arith.maximumf %0, %cst : f32
    %c0_0 = arith.constant 0 : index
    %2 = memref.load %arg2[%c0_0] : memref<1xf32, #tpu.memory_space<smem>>
    %cst_1 = arith.constant 0.000000e+00 : f32
    %3 = arith.maximumf %2, %cst_1 : f32
    %c0_2 = arith.constant 0 : index
    %4 = memref.load %arg3[%c0_2] : memref<1xf32, #tpu.memory_space<smem>>
    %cst_3 = arith.constant 0.000000e+00 : f32
    %5 = arith.maximumf %4, %cst_3 : f32
    %6 = arith.addf %5, %3 : f32
    %7 = arith.divf %5, %6 : f32
    %8 = arith.mulf %7, %3 : f32
    %c0_4 = arith.constant 0 : index
    %c0_5 = arith.constant 0 : index
    %c0_6 = arith.constant 0 : index
    %9 = vector.load %arg8[%c0_4, %c0_5, %c0_6] : memref<8x20x100xf32, #tpu.memory_space<vmem>>, vector<8x20x100xf32>
    %c0_7 = arith.constant 0 : index
    %c0_8 = arith.constant 0 : index
    %c0_9 = arith.constant 0 : index
    %10 = vector.load %arg4[%c0_7, %c0_8, %c0_9] : memref<8x1x100xf32, #tpu.memory_space<vmem>>, vector<8x1x100xf32>
    %c0_10 = arith.constant 0 : index
    %c0_11 = arith.constant 0 : index
    %c0_12 = arith.constant 0 : index
    %11 = vector.load %arg5[%c0_10, %c0_11, %c0_12] : memref<8x1x20xf32, #tpu.memory_space<vmem>>, vector<8x1x20xf32>
    %c0_13 = arith.constant 0 : index
    %c0_14 = arith.constant 0 : index
    %c0_15 = arith.constant 0 : index
    %12 = vector.load %arg6[%c0_13, %c0_14, %c0_15] : memref<8x1x20xf32, #tpu.memory_space<vmem>>, vector<8x1x20xf32>
    %c0_16 = arith.constant 0 : index
    %c0_17 = arith.constant 0 : index
    %c0_18 = arith.constant 0 : index
    %13 = vector.load %arg7[%c0_16, %c0_17, %c0_18] : memref<8x1x20xf32, #tpu.memory_space<vmem>>, vector<8x1x20xf32>
    %cst_19 = arith.constant 2.000000e+00 : f32
    %14 = vector.broadcast %cst_19 : f32 to vector<8x1x20xf32>
    %15 = arith.mulf %14, %11 : vector<8x1x20xf32>
    %16 = arith.subf %15, %12 : vector<8x1x20xf32>
    %cst_20 = arith.constant dense<0.000000e+00> : vector<8x1x100xf32>
    %17 = tpu.matmul %16, %9, %cst_20 {dimension_numbers = #tpu.dot_dimension_numbers<[2], [1], [1], [2], [0, 0, 0, 1, 1, 2], [0], [0]>} : vector<8x1x20xf32>, vector<8x20x100xf32>, vector<8x1x100xf32> -> vector<8x1x100xf32>
    %18 = vector.broadcast %1 : f32 to vector<8x1x100xf32>
    %19 = arith.mulf %18, %17 : vector<8x1x100xf32>
    %20 = arith.subf %10, %19 : vector<8x1x100xf32>
    %cst_21 = arith.constant 0.000000e+00 : f32
    %21 = vector.broadcast %cst_21 : f32 to vector<8x1x100xf32>
    %22 = arith.maximumf %20, %21 : vector<8x1x100xf32>
    %c0_22 = arith.constant 0 : index
    %c0_23 = arith.constant 0 : index
    %c0_24 = arith.constant 0 : index
    %23 = vector.load %arg9[%c0_22, %c0_23, %c0_24] : memref<8x1x100xf32, #tpu.memory_space<vmem>>, vector<8x1x100xf32>
    tpu.vector_store %arg9[%c0_22, %c0_23, %c0_24], %22 {strides = array<i32>} : memref<8x1x100xf32, #tpu.memory_space<vmem>>, vector<8x1x100xf32>,
    %cst_25 = arith.constant dense<0.000000e+00> : vector<8x20x1xf32>
    %24 = tpu.matmul %9, %22, %cst_25 {dimension_numbers = #tpu.dot_dimension_numbers<[2], [2], [1], [1], [0, 0, 0, 1, 1, 1], [0], [0]>} : vector<8x20x100xf32>, vector<8x1x100xf32>, vector<8x20x1xf32> -> vector<8x20x1xf32>
    %25 = tpu.transpose %24, [0, 2, 1] : vector<8x20x1xf32> -> vector<8x1x20xf32>
    %26 = vector.broadcast %7 : f32 to vector<8x1x20xf32>
    %27 = arith.mulf %26, %11 : vector<8x1x20xf32>
    %28 = arith.subf %25, %13 : vector<8x1x20xf32>
    %29 = vector.broadcast %8 : f32 to vector<8x1x20xf32>
    %30 = arith.mulf %29, %28 : vector<8x1x20xf32>
    %31 = arith.addf %27, %30 : vector<8x1x20xf32>
    %c0_26 = arith.constant 0 : index
    %c0_27 = arith.constant 0 : index
    %c0_28 = arith.constant 0 : index
    %32 = vector.load %arg10[%c0_26, %c0_27, %c0_28] : memref<8x1x20xf32, #tpu.memory_space<vmem>>, vector<8x1x20xf32>
    tpu.vector_store %arg10[%c0_26, %c0_27, %c0_28], %31 {strides = array<i32>} : memref<8x1x20xf32, #tpu.memory_space<vmem>>, vector<8x1x20xf32>,
    return
  }
  func.func @transform_0(%arg0: i32) -> i32 {
    %c0_i32 = arith.constant 0 : i32
    %c0_i32_0 = arith.constant 0 : i32
    return %c0_i32 : i32
  }
  func.func @transform_1(%arg0: i32) -> i32 {
    %c0_i32 = arith.constant 0 : i32
    %c0_i32_0 = arith.constant 0 : i32
    return %c0_i32 : i32
  }
  func.func @transform_2(%arg0: i32) -> i32 {
    %c0_i32 = arith.constant 0 : i32
    %c0_i32_0 = arith.constant 0 : i32
    return %c0_i32 : i32
  }
  func.func @transform_3(%arg0: i32) -> (i32, i32, i32) {
    %c0_i32 = arith.constant 0 : i32
    %c0_i32_0 = arith.constant 0 : i32
    %c0_i32_1 = arith.constant 0 : i32
    return %arg0, %c0_i32, %c0_i32_0 : i32, i32, i32
  }
  func.func @transform_4(%arg0: i32) -> (i32, i32, i32) {
    %c0_i32 = arith.constant 0 : i32
    %c0_i32_0 = arith.constant 0 : i32
    %c0_i32_1 = arith.constant 0 : i32
    return %arg0, %c0_i32, %c0_i32_0 : i32, i32, i32
  }
  func.func @transform_5(%arg0: i32) -> (i32, i32, i32) {
    %c0_i32 = arith.constant 0 : i32
    %c0_i32_0 = arith.constant 0 : i32
    %c0_i32_1 = arith.constant 0 : i32
    return %arg0, %c0_i32, %c0_i32_0 : i32, i32, i32
  }
  func.func @transform_6(%arg0: i32) -> (i32, i32, i32) {
    %c0_i32 = arith.constant 0 : i32
    %c0_i32_0 = arith.constant 0 : i32
    %c0_i32_1 = arith.constant 0 : i32
    return %arg0, %c0_i32, %c0_i32_0 : i32, i32, i32
  }
  func.func @transform_7(%arg0: i32) -> (i32, i32, i32) {
    %c0_i32 = arith.constant 0 : i32
    %c0_i32_0 = arith.constant 0 : i32
    %c0_i32_1 = arith.constant 0 : i32
    return %arg0, %c0_i32, %c0_i32_0 : i32, i32, i32
  }
  func.func @transform_8(%arg0: i32) -> (i32, i32, i32) {
    %c0_i32 = arith.constant 0 : i32
    %c0_i32_0 = arith.constant 0 : i32
    %c0_i32_1 = arith.constant 0 : i32
    return %arg0, %c0_i32, %c0_i32_0 : i32, i32, i32
  }
  func.func @transform_9(%arg0: i32) -> (i32, i32, i32) {
    %c0_i32 = arith.constant 0 : i32
    %c0_i32_0 = arith.constant 0 : i32
    %c0_i32_1 = arith.constant 0 : i32
    return %arg0, %c0_i32, %c0_i32_0 : i32, i32, i32
  }
}

</mosaic_0001>

<llo_original>
// kernel: tpu_custom_call.1
$region0: #{tpu_custom_call.1}
  #allocation0 [shape = 'u32[]', space=smem, size = 0x4, offset = 0x4, fixed_abs, tag = 'smem constant byte address 0x4 - core index']
  #allocation1 [shape = 'u32[144,128]{1,0:T(1,128)}', space=vmem, size = 0x12000, scoped, tag = 'internal scratch']
  #allocation2 [shape = 'f32[1]{0:T(128)S(6)}', space=smem, size = 0x200, scoped, tag = 'scoped memory for tpu_custom_call.1']
  #allocation3 [shape = 'f32[1]{0:T(128)S(6)}', space=smem, size = 0x200, scoped, tag = 'scoped memory for tpu_custom_call.1']
  #allocation4 [shape = 'f32[1]{0:T(128)S(6)}', space=smem, size = 0x200, scoped, tag = 'scoped memory for tpu_custom_call.1']
  %s0 = inlined_call_operand.<no memory space> [shape: f32[1], index: 0, kind: input, shape index: {}]
  %s1 = inlined_call_operand.<no memory space> [shape: f32[1], index: 1, kind: input, shape index: {}]
  %s2 = inlined_call_operand.<no memory space> [shape: f32[1], index: 2, kind: input, shape index: {}]
  %s3 = inlined_call_operand.hbm [shape: f32[16,1,100], index: 3, kind: input, shape index: {}]
  %s4 = inlined_call_operand.hbm [shape: f32[16,1,20], index: 4, kind: input, shape index: {}]
  %s5 = inlined_call_operand.hbm [shape: f32[16,1,20], index: 5, kind: input, shape index: {}]
  %s6 = inlined_call_operand.hbm [shape: f32[16,1,20], index: 6, kind: input, shape index: {}]
  %s7 = inlined_call_operand.hbm [shape: f32[16,20,100], index: 7, kind: input, shape index: {}]
  %s8 = inlined_call_operand.hbm [shape: f32[16,1,100], index: 8, kind: output, shape index: {0}]
  %s9 = inlined_call_operand.hbm [shape: f32[16,1,20], index: 9, kind: output, shape index: {1}]
  %10 = xla_tuple %s8, %s9
  %s11 = sld [smem:[#allocation0]]
  $region93: #{tpu_custom_call.1} parent=0
    _
  %s13 = ssub.s32 1, %s11
  %s14 = scalar_select 0, %s13, %s11
  %15 = sst [smem:[#allocation2]] %s0
  %16 = sst [smem:[#allocation3]] %s1
  %17 = sst [smem:[#allocation4]] %s2
  $region1: #{tpu_custom_call.1} parent=0
    #allocation5 [shape = 'u8[8192]{0}', space=vmem, size = 0x2000, scoped, tag = 'input window, operand 3']
    #allocation6 [shape = 's32[2]{0}', space=sflag, size = 0x8, scoped, tag = 'scoped memory for tpu_custom_call.1']
    #allocation7 [shape = 's32[2]{0}', space=sflag, size = 0x8, scoped, tag = 'scoped memory for tpu_custom_call.1']
    #allocation8 [shape = 'u8[8192]{0}', space=vmem, size = 0x2000, scoped, tag = 'input window, operand 4']
    #allocation9 [shape = 's32[2]{0}', space=sflag, size = 0x8, scoped, tag = 'scoped memory for tpu_custom_call.1']
    #allocation10 [shape = 'u8[8192]{0}', space=vmem, size = 0x2000, scoped, tag = 'input window, operand 5']
    #allocation11 [shape = 'u8[8192]{0}', space=vmem, size = 0x2000, scoped, tag = 'input window, operand 6']
    #allocation12 [shape = 's32[2]{0}', space=sflag, size = 0x8, scoped, tag = 'scoped memory for tpu_custom_call.1']
    #allocation13 [shape = 'u8[196608]{0}', space=vmem, size = 0x30000, scoped, tag = 'input window, operand 7']
    #allocation14 [shape = 'u8[8192]{0}', space=vmem, size = 0x2000, scoped, tag = 'output window, operand 0']
    #allocation15 [shape = 'u8[8192]{0}', space=vmem, size = 0x2000, scoped, tag = 'output window, operand 1']
    #allocation16 [shape = 's32[2]{0}', space=sflag, size = 0x8, scoped, tag = 'scoped memory for tpu_custom_call.1']
    %18 = vsyncpa [#allocation6], 0
    %s19 = scalar_lea.sflag [#allocation6], 1
    %20 = vsyncpa %s19, 0
    %21 = vsyncpa [#allocation9], 0
    %s22 = scalar_lea.sflag [#allocation9], 1
    %23 = vsyncpa %s22, 0
    %24 = vsyncpa [#allocation12], 0
    %s25 = scalar_lea.sflag [#allocation12], 1
    %26 = vsyncpa %s25, 0
    %27 = vsyncpa [#allocation7], 0
    %s28 = scalar_lea.sflag [#allocation7], 1
    %29 = vsyncpa %s28, 0
    %30 = vsyncpa [#allocation16], 0
    %s31 = scalar_lea.sflag [#allocation16], 1
    %32 = vsyncpa %s31, 0
    loop: start=0, step=1, limit=4
    $region2: #{tpu_custom_call.1} parent=1 // loop_pre_header
      _
    $region3: #{tpu_custom_call.1} parent=1 // loop_header
      %s34 = sphi 0, %s38
      %p35 = scmp.ge.s32.totalorder %s34, 4
      %s42 = sphi 0, %s42
      %s44 = sphi 0, %s42
      %s45 = sphi 0, %s44
      %s59 = sphi 0, %s45
      %s63 = sphi 0, %s63
      %s65 = sphi 0, %s63
      %s66 = sphi 0, %s65
      %s80 = sphi 0, %s66
      %s84 = sphi 0, %s84
      %s86 = sphi 0, %s84
      %s87 = sphi 0, %s86
      %s101 = sphi 0, %s87
      %s107 = sphi 0, %s109
      %s110 = sphi 0, %s107
      %s111 = sphi 0, %s110
      %s127 = sphi 0, %s111
      %s133 = sphi 0, %s135
      %s136 = sphi 0, %s133
      %s137 = sphi 0, %s136
      %s153 = sphi 0, %s137
      %s159 = sphi 0, %s161
      %s162 = sphi 0, %s159
      %s163 = sphi 0, %s162
      %s179 = sphi 0, %s163
      %s185 = sphi 0, %s187
      %s188 = sphi 0, %s185
      %s189 = sphi 0, %s188
      %s205 = sphi 0, %s189
      %s211 = sphi 0, %s213
      %s214 = sphi 0, %s211
      %s215 = sphi 0, %s214
      %s231 = sphi 0, %s215
      %s237 = sphi 0, %s239
      %s240 = sphi 0, %s237
      %s241 = sphi 0, %s240
      %s257 = sphi 0, %s241
      %s263 = sphi 0, %s265
      %s266 = sphi 0, %s263
      %s267 = sphi 0, %s266
      %s283 = sphi 0, %s267
    $region4: #{tpu_custom_call.1} parent=1 // loop_header_branch
      %37 = sbr.rel (%p35) target = $region8
    $region5: #{tpu_custom_call.1} parent=1 // loop_body
      %s39 = ssub.s32 %s34, 1
      %s40 = ssub.s32 %s34, 2
      %s41 = sadd.s32 %s34, 1
      %s43 = sadd.s32 %s42, 1
      %p46 = scmp.eq.s32.totalorder %s34, 1
      %p47 = scmp.ne.s32.totalorder %s42, %s44
      %p48 = scmp.eq.s32.totalorder %s34, 0
      %p49 = por %p47, %p48
      %p50 = scmp.ne.s32.totalorder %s42, %s44
      %p51 = scmp.eq.s32.totalorder %s39, 1
      %p52 = por %p50, %p51
      %p53 = scmp.ne.s32.totalorder %s44, %s45
      %p54 = scmp.eq.s32.totalorder %s39, 0
      %p55 = por %p53, %p54
      %p56 = scmp.ne.s32.totalorder %s44, %s45
      %p57 = scmp.eq.s32.totalorder %s40, 1
      %p58 = por %p56, %p57
      %p60 = scmp.ne.s32.totalorder %s45, %s59
      %p61 = scmp.eq.s32.totalorder %s40, 0
      %p62 = por %p60, %p61
      %s64 = sadd.s32 %s63, 1
      %p67 = scmp.eq.s32.totalorder %s34, 1
      %p68 = scmp.ne.s32.totalorder %s63, %s65
      %p69 = scmp.eq.s32.totalorder %s34, 0
      %p70 = por %p68, %p69
      %p71 = scmp.ne.s32.totalorder %s63, %s65
      %p72 = scmp.eq.s32.totalorder %s39, 1
      %p73 = por %p71, %p72
      %p74 = scmp.ne.s32.totalorder %s65, %s66
      %p75 = scmp.eq.s32.totalorder %s39, 0
      %p76 = por %p74, %p75
      %p77 = scmp.ne.s32.totalorder %s65, %s66
      %p78 = scmp.eq.s32.totalorder %s40, 1
      %p79 = por %p77, %p78
      %p81 = scmp.ne.s32.totalorder %s66, %s80
      %p82 = scmp.eq.s32.totalorder %s40, 0
      %p83 = por %p81, %p82
      %s85 = sadd.s32 %s84, 1
      %p88 = scmp.eq.s32.totalorder %s34, 1
      %p89 = scmp.ne.s32.totalorder %s84, %s86
      %p90 = scmp.eq.s32.totalorder %s34, 0
      %p91 = por %p89, %p90
      %p92 = scmp.ne.s32.totalorder %s84, %s86
      %p93 = scmp.eq.s32.totalorder %s39, 1
      %p94 = por %p92, %p93
      %p95 = scmp.ne.s32.totalorder %s86, %s87
      %p96 = scmp.eq.s32.totalorder %s39, 0
      %p97 = por %p95, %p96
      %p98 = scmp.ne.s32.totalorder %s86, %s87
      %p99 = scmp.eq.s32.totalorder %s40, 1
      %p100 = por %p98, %p99
      %p102 = scmp.ne.s32.totalorder %s87, %s101
      %p103 = scmp.eq.s32.totalorder %s40, 0
      %p104 = por %p102, %p103
      %s105 = ssub.s32 %s34, %s41
      %p106 = scmp.eq.s32.totalorder %s105, 0
      %s108 = sadd.s32 %s107, 1
      %s109 = scalar_select %p106, %s107, %s108
      %p112 = pneg %p106
      %p113 = scmp.eq.s32.totalorder %s34, 1
      %p114 = por %p112, %p113
      %p115 = scmp.ne.s32.totalorder %s107, %s110
      %p116 = scmp.eq.s32.totalorder %s34, 0
      %p117 = por %p115, %p116
      %p118 = scmp.ne.s32.totalorder %s107, %s110
      %p119 = scmp.eq.s32.totalorder %s39, 1
      %p120 = por %p118, %p119
      %p121 = scmp.ne.s32.totalorder %s110, %s111
      %p122 = scmp.eq.s32.totalorder %s39, 0
      %p123 = por %p121, %p122
      %p124 = scmp.ne.s32.totalorder %s110, %s111
      %p125 = scmp.eq.s32.totalorder %s40, 1
      %p126 = por %p124, %p125
      %p128 = scmp.ne.s32.totalorder %s111, %s127
      %p129 = scmp.eq.s32.totalorder %s40, 0
      %p130 = por %p128, %p129
      %s131 = ssub.s32 %s34, %s41
      %p132 = scmp.eq.s32.totalorder %s131, 0
      %s134 = sadd.s32 %s133, 1
      %s135 = scalar_select %p132, %s133, %s134
      %p138 = pneg %p132
      %p139 = scmp.eq.s32.totalorder %s34, 1
      %p140 = por %p138, %p139
      %p141 = scmp.ne.s32.totalorder %s133, %s136
      %p142 = scmp.eq.s32.totalorder %s34, 0
      %p143 = por %p141, %p142
      %p144 = scmp.ne.s32.totalorder %s133, %s136
      %p145 = scmp.eq.s32.totalorder %s39, 1
      %p146 = por %p144, %p145
      %p147 = scmp.ne.s32.totalorder %s136, %s137
      %p148 = scmp.eq.s32.totalorder %s39, 0
      %p149 = por %p147, %p148
      %p150 = scmp.ne.s32.totalorder %s136, %s137
      %p151 = scmp.eq.s32.totalorder %s40, 1
      %p152 = por %p150, %p151
      %p154 = scmp.ne.s32.totalorder %s137, %s153
      %p155 = scmp.eq.s32.totalorder %s40, 0
      %p156 = por %p154, %p155
      %s157 = ssub.s32 %s34, %s41
      %p158 = scmp.eq.s32.totalorder %s157, 0
      %s160 = sadd.s32 %s159, 1
      %s161 = scalar_select %p158, %s159, %s160
      %p164 = pneg %p158
      %p165 = scmp.eq.s32.totalorder %s34, 1
      %p166 = por %p164, %p165
      %p167 = scmp.ne.s32.totalorder %s159, %s162
      %p168 = scmp.eq.s32.totalorder %s34, 0
      %p169 = por %p167, %p168
      %p170 = scmp.ne.s32.totalorder %s159, %s162
      %p171 = scmp.eq.s32.totalorder %s39, 1
      %p172 = por %p170, %p171
      %p173 = scmp.ne.s32.totalorder %s162, %s163
      %p174 = scmp.eq.s32.totalorder %s39, 0
      %p175 = por %p173, %p174
      %p176 = scmp.ne.s32.totalorder %s162, %s163
      %p177 = scmp.eq.s32.totalorder %s40, 1
      %p178 = por %p176, %p177
      %p180 = scmp.ne.s32.totalorder %s163, %s179
      %p181 = scmp.eq.s32.totalorder %s40, 0
      %p182 = por %p180, %p181
      %s183 = ssub.s32 %s34, %s41
      %p184 = scmp.eq.s32.totalorder %s183, 0
      %s186 = sadd.s32 %s185, 1
      %s187 = scalar_select %p184, %s185, %s186
      %p190 = pneg %p184
      %p191 = scmp.eq.s32.totalorder %s34, 1
      %p192 = por %p190, %p191
      %p193 = scmp.ne.s32.totalorder %s185, %s188
      %p194 = scmp.eq.s32.totalorder %s34, 0
      %p195 = por %p193, %p194
      %p196 = scmp.ne.s32.totalorder %s185, %s188
      %p197 = scmp.eq.s32.totalorder %s39, 1
      %p198 = por %p196, %p197
      %p199 = scmp.ne.s32.totalorder %s188, %s189
      %p200 = scmp.eq.s32.totalorder %s39, 0
      %p201 = por %p199, %p200
      %p202 = scmp.ne.s32.totalorder %s188, %s189
      %p203 = scmp.eq.s32.totalorder %s40, 1
      %p204 = por %p202, %p203
      %p206 = scmp.ne.s32.totalorder %s189, %s205
      %p207 = scmp.eq.s32.totalorder %s40, 0
      %p208 = por %p206, %p207
      %s209 = ssub.s32 %s34, %s41
      %p210 = scmp.eq.s32.totalorder %s209, 0
      %s212 = sadd.s32 %s211, 1
      %s213 = scalar_select %p210, %s211, %s212
      %p216 = pneg %p210
      %p217 = scmp.eq.s32.totalorder %s34, 1
      %p218 = por %p216, %p217
      %p219 = scmp.ne.s32.totalorder %s211, %s214
      %p220 = scmp.eq.s32.totalorder %s34, 0
      %p221 = por %p219, %p220
      %p222 = scmp.ne.s32.totalorder %s211, %s214
      %p223 = scmp.eq.s32.totalorder %s39, 1
      %p224 = por %p222, %p223
      %p225 = scmp.ne.s32.totalorder %s214, %s215
      %p226 = scmp.eq.s32.totalorder %s39, 0
      %p227 = por %p225, %p226
      %p228 = scmp.ne.s32.totalorder %s214, %s215
      %p229 = scmp.eq.s32.totalorder %s40, 1
      %p230 = por %p228, %p229
      %p232 = scmp.ne.s32.totalorder %s215, %s231
      %p233 = scmp.eq.s32.totalorder %s40, 0
      %p234 = por %p232, %p233
      %s235 = ssub.s32 %s34, %s41
      %p236 = scmp.eq.s32.totalorder %s235, 0
      %s238 = sadd.s32 %s237, 1
      %s239 = scalar_select %p236, %s237, %s238
      %p242 = pneg %p236
      %p243 = scmp.eq.s32.totalorder %s34, 1
      %p244 = por %p242, %p243
      %p245 = scmp.ne.s32.totalorder %s237, %s240
      %p246 = scmp.eq.s32.totalorder %s34, 0
      %p247 = por %p245, %p246
      %p248 = scmp.ne.s32.totalorder %s237, %s240
      %p249 = scmp.eq.s32.totalorder %s39, 1
      %p250 = por %p248, %p249
      %p251 = scmp.ne.s32.totalorder %s240, %s241
      %p252 = scmp.eq.s32.totalorder %s39, 0
      %p253 = por %p251, %p252
      %p254 = scmp.ne.s32.totalorder %s240, %s241
      %p255 = scmp.eq.s32.totalorder %s40, 1
      %p256 = por %p254, %p255
      %p258 = scmp.ne.s32.totalorder %s241, %s257
      %p259 = scmp.eq.s32.totalorder %s40, 0
      %p260 = por %p258, %p259
      %s261 = ssub.s32 %s34, %s41
      %p262 = scmp.eq.s32.totalorder %s261, 0
      %s264 = sadd.s32 %s263, 1
      %s265 = scalar_select %p262, %s263, %s264
      %p268 = pneg %p262
      %p269 = scmp.eq.s32.totalorder %s34, 1
      %p270 = por %p268, %p269
      %p271 = scmp.ne.s32.totalorder %s263, %s266
      %p272 = scmp.eq.s32.totalorder %s34, 0
      %p273 = por %p271, %p272
      %p274 = scmp.ne.s32.totalorder %s263, %s266
      %p275 = scmp.eq.s32.totalorder %s39, 1
      %p276 = por %p274, %p275
      %p277 = scmp.ne.s32.totalorder %s266, %s267
      %p278 = scmp.eq.s32.totalorder %s39, 0
      %p279 = por %p277, %p278
      %p280 = scmp.ne.s32.totalorder %s266, %s267
      %p281 = scmp.eq.s32.totalorder %s40, 1
      %p282 = por %p280, %p281
      %p284 = scmp.ne.s32.totalorder %s267, %s283
      %p285 = scmp.eq.s32.totalorder %s40, 0
      %p286 = por %p284, %p285
      %p287 = scmp.le.s32.totalorder 1, %s34
      %p288 = scmp.lt.s32.totalorder %s34, 3
      %p289 = pnand %p287, %p288
      %p290 = pneg %p289
      // Predicated region
      $region9: #{tpu_custom_call.1} parent=5 // pred_check
        _
      $region10: #{tpu_custom_call.1} parent=5 // pred_check_branch
        %292 = sbr.rel (%p289) target = $region12
      $region11: #{tpu_custom_call.1} parent=5 // pred_region
        %s293 = ssub.s32 %s34, 1
        // Predicated region
        $region13: #{tpu_custom_call.1} parent=11 // pred_check
          %p294 = pneg %p55
        $region14: #{tpu_custom_call.1} parent=11 // pred_check_branch
          %296 = sbr.rel (%p294) target = $region16
        $region15: #{tpu_custom_call.1} parent=11 // pred_region
          _
        $region16: #{tpu_custom_call.1} parent=11 // pred_fallthru
          _
        // Predicated region
        $region17: #{tpu_custom_call.1} parent=11 // pred_check
          %p297 = pneg %p76
        $region18: #{tpu_custom_call.1} parent=11 // pred_check_branch
          %299 = sbr.rel (%p297) target = $region20
        $region19: #{tpu_custom_call.1} parent=11 // pred_region
          _
        $region20: #{tpu_custom_call.1} parent=11 // pred_fallthru
          _
        // Predicated region
        $region21: #{tpu_custom_call.1} parent=11 // pred_check
          %p300 = pneg %p97
        $region22: #{tpu_custom_call.1} parent=11 // pred_check_branch
          %302 = sbr.rel (%p300) target = $region24
        $region23: #{tpu_custom_call.1} parent=11 // pred_region
          _
        $region24: #{tpu_custom_call.1} parent=11 // pred_fallthru
          _
      $region12: #{tpu_custom_call.1} parent=5 // pred_fallthru
        _
      %p303 = scmp.lt.s32.totalorder %s34, 2
      // Predicated region
      $region25: #{tpu_custom_call.1} parent=5 // pred_check
        %p304 = pneg %p303
      $region26: #{tpu_custom_call.1} parent=5 // pred_check_branch
        %306 = sbr.rel (%p304) target = $region28
      $region27: #{tpu_custom_call.1} parent=5 // pred_region
        // Predicated region
        $region29: #{tpu_custom_call.1} parent=27 // pred_check
          %p307 = pneg %p117
        $region30: #{tpu_custom_call.1} parent=27 // pred_check_branch
          %309 = sbr.rel (%p307) target = $region32
        $region31: #{tpu_custom_call.1} parent=27 // pred_region
          %s310 = sand.u32 %s107, 1
          %s311 = scalar_lea.sflag [#allocation6], %s310
          %s312 = sand.u32 %s107, 1
          %s313 = smul.addr %s312, 8
          %s314 = scalar_lea.vmem [#allocation5], %s313
          %s315 = smul.u32 8, %s34
          %s317 = ssub.s32 128, 128
          %318 = vsyncadd %s311, %s317
          %s319 = smul.addr %s315, 16
          %s320 = scalar_lea.hbm %s3, %s319
          %s321 = sshll.u32 %s314, 4
          %s322 = int_to_ptr.vmem [resolvable:$true] %s321
          %327 = dma.hbm_to_vmem [thread:$0]  %s320, 128, %s322, %s311, 16, 16, 1
        $region32: #{tpu_custom_call.1} parent=27 // pred_fallthru
          _
        // Predicated region
        $region33: #{tpu_custom_call.1} parent=27 // pred_check
          %p328 = pneg %p143
        $region34: #{tpu_custom_call.1} parent=27 // pred_check_branch
          %330 = sbr.rel (%p328) target = $region36
        $region35: #{tpu_custom_call.1} parent=27 // pred_region
          %s331 = sand.u32 %s34, 1
          %s332 = scalar_lea.sflag [#allocation9], %s331
          %s333 = sand.u32 %s133, 1
          %s334 = smul.addr %s333, 8
          %s335 = scalar_lea.vmem [#allocation8], %s334
          %s336 = smul.u32 8, %s34
          %s338 = ssub.s32 128, 128
          %339 = vsyncadd %s332, %s338
          %s340 = smul.addr %s336, 16
          %s341 = scalar_lea.hbm %s4, %s340
          %s342 = sshll.u32 %s335, 4
          %s343 = int_to_ptr.vmem [resolvable:$true] %s342
          %348 = dma.hbm_to_vmem [thread:$0]  %s341, 128, %s343, %s332, 16, 16, 1
        $region36: #{tpu_custom_call.1} parent=27 // pred_fallthru
          _
        // Predicated region
        $region37: #{tpu_custom_call.1} parent=27 // pred_check
          %p349 = pneg %p169
        $region38: #{tpu_custom_call.1} parent=27 // pred_check_branch
          %351 = sbr.rel (%p349) target = $region40
        $region39: #{tpu_custom_call.1} parent=27 // pred_region
          %s352 = sand.u32 %s34, 1
          %s353 = scalar_lea.sflag [#allocation9], %s352
          %s354 = sand.u32 %s159, 1
          %s355 = smul.addr %s354, 8
          %s356 = scalar_lea.vmem [#allocation10], %s355
          %s357 = smul.u32 8, %s34
          %s359 = ssub.s32 128, 128
          %360 = vsyncadd %s353, %s359
          %s361 = smul.addr %s357, 16
          %s362 = scalar_lea.hbm %s5, %s361
          %s363 = sshll.u32 %s356, 4
          %s364 = int_to_ptr.vmem [resolvable:$true] %s363
          %369 = dma.hbm_to_vmem [thread:$0]  %s362, 128, %s364, %s353, 16, 16, 1
        $region40: #{tpu_custom_call.1} parent=27 // pred_fallthru
          _
        // Predicated region
        $region41: #{tpu_custom_call.1} parent=27 // pred_check
          %p370 = pneg %p195
        $region42: #{tpu_custom_call.1} parent=27 // pred_check_branch
          %372 = sbr.rel (%p370) target = $region44
        $region43: #{tpu_custom_call.1} parent=27 // pred_region
          %s373 = sand.u32 %s34, 1
          %s374 = scalar_lea.sflag [#allocation12], %s373
          %s375 = sand.u32 %s185, 1
          %s376 = smul.addr %s375, 8
          %s377 = scalar_lea.vmem [#allocation11], %s376
          %s378 = smul.u32 8, %s34
          %s380 = ssub.s32 128, 128
          %381 = vsyncadd %s374, %s380
          %s382 = smul.addr %s378, 16
          %s383 = scalar_lea.hbm %s6, %s382
          %s384 = sshll.u32 %s377, 4
          %s385 = int_to_ptr.vmem [resolvable:$true] %s384
          %390 = dma.hbm_to_vmem [thread:$0]  %s383, 128, %s385, %s374, 16, 16, 1
        $region44: #{tpu_custom_call.1} parent=27 // pred_fallthru
          _
        // Predicated region
        $region45: #{tpu_custom_call.1} parent=27 // pred_check
          %p391 = pneg %p221
        $region46: #{tpu_custom_call.1} parent=27 // pred_check_branch
          %393 = sbr.rel (%p391) target = $region48
        $region47: #{tpu_custom_call.1} parent=27 // pred_region
          %s394 = sand.u32 %s34, 1
          %s395 = scalar_lea.sflag [#allocation12], %s394
          %s396 = sand.u32 %s211, 1
          %s397 = smul.addr %s396, 192
          %s398 = scalar_lea.vmem [#allocation13], %s397
          %s399 = smul.u32 8, %s34
          %s401 = ssub.s32 3072, 3072
          %402 = vsyncadd %s395, %s401
          %s403 = smul.addr %s399, 3
          %s404 = smul.addr %s403, 128
          %s405 = scalar_lea.hbm %s7, %s404
          %s406 = sshll.u32 %s398, 4
          %s407 = int_to_ptr.vmem [resolvable:$true] %s406
          %412 = dma.hbm_to_vmem [thread:$0]  %s405, 3072, %s407, %s395, 128, 128, 8
        $region48: #{tpu_custom_call.1} parent=27 // pred_fallthru
          _
      $region28: #{tpu_custom_call.1} parent=5 // pred_fallthru
        _
      %p413 = scmp.le.s32.totalorder 1, %s34
      %p414 = scmp.lt.s32.totalorder %s34, 3
      %p415 = pnand %p413, %p414
      %p416 = pneg %p415
      // Predicated region
      $region49: #{tpu_custom_call.1} parent=5 // pred_check
        _
      $region50: #{tpu_custom_call.1} parent=5 // pred_check_branch
        %418 = sbr.rel (%p415) target = $region52
      $region51: #{tpu_custom_call.1} parent=5 // pred_region
        %s419 = ssub.s32 %s34, 1
        %s420 = sand.u32 %s110, 1
        %s421 = scalar_lea.sflag [#allocation6], %s420
        %s422 = sand.u32 %s110, 1
        %s423 = smul.addr %s422, 8
        %s424 = scalar_lea.vmem [#allocation5], %s423
        // Predicated region
        $region53: #{tpu_custom_call.1} parent=51 // pred_check
          %p425 = pneg %p123
        $region54: #{tpu_custom_call.1} parent=51 // pred_check_branch
          %427 = sbr.rel (%p425) target = $region56
        $region55: #{tpu_custom_call.1} parent=51 // pred_region
          %428 = dma.done %s421, 128
        $region56: #{tpu_custom_call.1} parent=51 // pred_fallthru
          _
        %s429 = sand.u32 %s39, 1
        %s430 = scalar_lea.sflag [#allocation9], %s429
        %s431 = sand.u32 %s136, 1
        %s432 = smul.addr %s431, 8
        %s433 = scalar_lea.vmem [#allocation8], %s432
        // Predicated region
        $region57: #{tpu_custom_call.1} parent=51 // pred_check
          %p434 = pneg %p149
        $region58: #{tpu_custom_call.1} parent=51 // pred_check_branch
          %436 = sbr.rel (%p434) target = $region60
        $region59: #{tpu_custom_call.1} parent=51 // pred_region
          %437 = dma.done %s430, 128
        $region60: #{tpu_custom_call.1} parent=51 // pred_fallthru
          _
        %s438 = sand.u32 %s39, 1
        %s439 = scalar_lea.sflag [#allocation9], %s438
        %s440 = sand.u32 %s162, 1
        %s441 = smul.addr %s440, 8
        %s442 = scalar_lea.vmem [#allocation10], %s441
        // Predicated region
        $region61: #{tpu_custom_call.1} parent=51 // pred_check
          %p443 = pneg %p175
        $region62: #{tpu_custom_call.1} parent=51 // pred_check_branch
          %445 = sbr.rel (%p443) target = $region64
        $region63: #{tpu_custom_call.1} parent=51 // pred_region
          %446 = dma.done %s439, 128
        $region64: #{tpu_custom_call.1} parent=51 // pred_fallthru
          _
        %s447 = sand.u32 %s39, 1
        %s448 = scalar_lea.sflag [#allocation12], %s447
        %s449 = sand.u32 %s188, 1
        %s450 = smul.addr %s449, 8
        %s451 = scalar_lea.vmem [#allocation11], %s450
        // Predicated region
        $region65: #{tpu_custom_call.1} parent=51 // pred_check
          %p452 = pneg %p201
        $region66: #{tpu_custom_call.1} parent=51 // pred_check_branch
          %454 = sbr.rel (%p452) target = $region68
        $region67: #{tpu_custom_call.1} parent=51 // pred_region
          %455 = dma.done %s448, 128
        $region68: #{tpu_custom_call.1} parent=51 // pred_fallthru
          _
        %s456 = sand.u32 %s39, 1
        %s457 = scalar_lea.sflag [#allocation12], %s456
        %s458 = sand.u32 %s214, 1
        %s459 = smul.addr %s458, 192
        %s460 = scalar_lea.vmem [#allocation13], %s459
        // Predicated region
        $region69: #{tpu_custom_call.1} parent=51 // pred_check
          %p461 = pneg %p227
        $region70: #{tpu_custom_call.1} parent=51 // pred_check_branch
          %463 = sbr.rel (%p461) target = $region72
        $region71: #{tpu_custom_call.1} parent=51 // pred_region
          %464 = dma.done %s457, 3072
        $region72: #{tpu_custom_call.1} parent=51 // pred_fallthru
          _
        %p465 = pneg %p55
        %p466 = pneg %p52
        %p467 = pneg %p76
        %p468 = pneg %p73
        %p469 = pneg %p97
        %p470 = pneg %p94
        %s471 = sand.u32 %s110, 1
        %s472 = scalar_lea.sflag [#allocation6], %s471
        %s473 = sand.u32 %s110, 1
        %s474 = smul.addr %s473, 8
        %s475 = scalar_lea.vmem [#allocation5], %s474
        %p476 = pneg %p123
        %p477 = pneg %p120
        %s478 = sand.u32 %s39, 1
        %s479 = scalar_lea.sflag [#allocation9], %s478
        %s480 = sand.u32 %s136, 1
        %s481 = smul.addr %s480, 8
        %s482 = scalar_lea.vmem [#allocation8], %s481
        %p483 = pneg %p149
        %p484 = pneg %p146
        %s485 = sand.u32 %s39, 1
        %s486 = scalar_lea.sflag [#allocation9], %s485
        %s487 = sand.u32 %s162, 1
        %s488 = smul.addr %s487, 8
        %s489 = scalar_lea.vmem [#allocation10], %s488
        %p490 = pneg %p175
        %p491 = pneg %p172
        %s492 = sand.u32 %s39, 1
        %s493 = scalar_lea.sflag [#allocation12], %s492
        %s494 = sand.u32 %s188, 1
        %s495 = smul.addr %s494, 8
        %s496 = scalar_lea.vmem [#allocation11], %s495
        %p497 = pneg %p201
        %p498 = pneg %p198
        %s499 = sand.u32 %s39, 1
        %s500 = scalar_lea.sflag [#allocation12], %s499
        %s501 = sand.u32 %s214, 1
        %s502 = smul.addr %s501, 192
        %s503 = scalar_lea.vmem [#allocation13], %s502
        %p504 = pneg %p227
        %p505 = pneg %p224
        %p506 = pneg %p253
        %p507 = pneg %p250
        %s508 = sand.u32 %s240, 1
        %s509 = scalar_lea.sflag [#allocation7], %s508
        %s510 = sand.u32 %s240, 1
        %s511 = smul.addr %s510, 8
        %s512 = scalar_lea.vmem [#allocation14], %s511
        %p513 = pneg %p279
        %p514 = pneg %p276
        %s515 = sand.u32 %s266, 1
        %s516 = scalar_lea.sflag [#allocation16], %s515
        %s517 = sand.u32 %s266, 1
        %s518 = smul.addr %s517, 8
        %s519 = scalar_lea.vmem [#allocation15], %s518
        %s520 = smul.u32 8, %s39
        %s521 = smul.u32 8, %s39
        %s522 = smul.u32 8, %s39
        %s523 = smul.u32 8, %s39
        %s524 = smul.u32 8, %s39
        %s525 = smul.u32 8, %s39
        %s526 = smul.u32 8, %s39
        %s527 = sld [smem:[#allocation2]]
        %s528 = smax.f32 %s527, 0.0
        %s529 = sld [smem:[#allocation3]]
        %s530 = smax.f32 %s529, 0.0
        %s531 = sld [smem:[#allocation4]]
        %s532 = smax.f32 %s531, 0.0
        %s533 = sadd.f32 %s532, %s530
        %v534 = vstv %s533
        %v535 = vrcp.pop %v534
        %s536 = vtos %v535
        %s537 = smul.f32 %s532, %s536
        %s538 = smul.f32 %s537, %s530
        %v539 = vld [vmem:[%s460] sm:$0xff]
        %v540 = vld [vmem:[%s460 + $0x8] sm:$0xff]
        %v541 = vld [vmem:[%s460 + $0x10] sm:$0xf]
        %v542 = vld [vmem:[%s460 + $0x18] sm:$0xff]
        %v543 = vld [vmem:[%s460 + $0x20] sm:$0xff]
        %v544 = vld [vmem:[%s460 + $0x28] sm:$0xf]
        %v545 = vld [vmem:[%s460 + $0x30] sm:$0xff]
        %v546 = vld [vmem:[%s460 + $0x38] sm:$0xff]
        %v547 = vld [vmem:[%s460 + $0x40] sm:$0xf]
        %v548 = vld [vmem:[%s460 + $0x48] sm:$0xff]
        %v549 = vld [vmem:[%s460 + $0x50] sm:$0xff]
        %v550 = vld [vmem:[%s460 + $0x58] sm:$0xf]
        %v551 = vld [vmem:[%s460 + $0x60] sm:$0xff]
        %v552 = vld [vmem:[%s460 + $0x68] sm:$0xff]
        %v553 = vld [vmem:[%s460 + $0x70] sm:$0xf]
        %v554 = vld [vmem:[%s460 + $0x78] sm:$0xff]
        %v555 = vld [vmem:[%s460 + $0x80] sm:$0xff]
        %v556 = vld [vmem:[%s460 + $0x88] sm:$0xf]
        %v557 = vld [vmem:[%s460 + $0x90] sm:$0xff]
        %v558 = vld [vmem:[%s460 + $0x98] sm:$0xff]
        %v559 = vld [vmem:[%s460 + $0xa0] sm:$0xf]
        %v560 = vld [vmem:[%s460 + $0xa8] sm:$0xff]
        %v561 = vld [vmem:[%s460 + $0xb0] sm:$0xff]
        %v562 = vld [vmem:[%s460 + $0xb8] sm:$0xf]
        %v563 = vld [vmem:[%s424] sm:$0x1]
        %v564 = vld [vmem:[%s424 + $0x1] sm:$0x1]
        %v565 = vld [vmem:[%s424 + $0x2] sm:$0x1]
        %v566 = vld [vmem:[%s424 + $0x3] sm:$0x1]
        %v567 = vld [vmem:[%s424 + $0x4] sm:$0x1]
        %v568 = vld [vmem:[%s424 + $0x5] sm:$0x1]
        %v569 = vld [vmem:[%s424 + $0x6] sm:$0x1]
        %v570 = vld [vmem:[%s424 + $0x7] sm:$0x1]
        %v571 = vld [vmem:[%s433] sm:$0x1]
        %v572 = vld [vmem:[%s433 + $0x1] sm:$0x1]
        %v573 = vld [vmem:[%s433 + $0x2] sm:$0x1]
        %v574 = vld [vmem:[%s433 + $0x3] sm:$0x1]
        %v575 = vld [vmem:[%s433 + $0x4] sm:$0x1]
        %v576 = vld [vmem:[%s433 + $0x5] sm:$0x1]
        %v577 = vld [vmem:[%s433 + $0x6] sm:$0x1]
        %v578 = vld [vmem:[%s433 + $0x7] sm:$0x1]
        %v579 = vld [vmem:[%s442] sm:$0x1]
        %v580 = vld [vmem:[%s442 + $0x1] sm:$0x1]
        %v581 = vld [vmem:[%s442 + $0x2] sm:$0x1]
        %v582 = vld [vmem:[%s442 + $0x3] sm:$0x1]
        %v583 = vld [vmem:[%s442 + $0x4] sm:$0x1]
        %v584 = vld [vmem:[%s442 + $0x5] sm:$0x1]
        %v585 = vld [vmem:[%s442 + $0x6] sm:$0x1]
        %v586 = vld [vmem:[%s442 + $0x7] sm:$0x1]
        %v587 = vld [vmem:[%s451] sm:$0x1]
        %v588 = vld [vmem:[%s451 + $0x1] sm:$0x1]
        %v589 = vld [vmem:[%s451 + $0x2] sm:$0x1]
        %v590 = vld [vmem:[%s451 + $0x3] sm:$0x1]
        %v591 = vld [vmem:[%s451 + $0x4] sm:$0x1]
        %v592 = vld [vmem:[%s451 + $0x5] sm:$0x1]
        %v593 = vld [vmem:[%s451 + $0x6] sm:$0x1]
        %v594 = vld [vmem:[%s451 + $0x7] sm:$0x1]
        %v595 = vmul.f32 %v571, 2.0
        %v596 = vmul.f32 %v572, 2.0
        %v597 = vmul.f32 %v573, 2.0
        %v598 = vmul.f32 %v574, 2.0
        %v599 = vmul.f32 %v575, 2.0
        %v600 = vmul.f32 %v576, 2.0
        %v601 = vmul.f32 %v577, 2.0
        %v602 = vmul.f32 %v578, 2.0
        %v603 = vsub.f32 %v595, %v579
        %v604 = vsub.f32 %v596, %v580
        %v605 = vsub.f32 %v597, %v581
        %v606 = vsub.f32 %v598, %v582
        %v607 = vsub.f32 %v599, %v583
        %v608 = vsub.f32 %v600, %v584
        %v609 = vsub.f32 %v601, %v585
        %v610 = vsub.f32 %v602, %v586
        %vm611 = vcmask 162816
        %v613 = vsel %vm611, %v603, 0
        %vm615 = vcmask 1043456
        %v617 = vsel %vm615, %v541, 0
        %619 = vmatprep.subr.mxu0 0.0
        %620 = vmatpush1.msra.mxu0 %v539
        %621 = vmatprep.subr.mxu0 0.0
        %622 = vmatpush1.msra.mxu0 %v540
        %623 = vmatprep.subr.mxu0 0.0
        %624 = vmatpush1.msra.mxu0 %v617
        %625 = vmatprep.subr.mxu0 0.0
        %626 = vmatpush1.msra.mxu0 0.0
        %627 = vmatprep.subr.mxu0 0.0
        %628 = vmatpush1.msra.mxu0 0.0
        %629 = vmatprep.subr.mxu0 0.0
        %630 = vmatpush1.msra.mxu0 0.0
        %631 = vmatprep.subr.mxu0 0.0
        %632 = vmatpush1.msra.mxu0 0.0
        %633 = vmatprep.subr.mxu0 0.0
        %634 = vmatpush1.msra.mxu0 0.0
        %635 = vmatprep.subr.mxu0 0.0
        %636 = vmatpush1.msra.mxu0 0.0
        %637 = vmatprep.subr.mxu0 0.0
        %638 = vmatpush1.msra.mxu0 0.0
        %639 = vmatprep.subr.mxu0 0.0
        %640 = vmatpush1.msra.mxu0 0.0
        %641 = vmatprep.subr.mxu0 0.0
        %642 = vmatpush1.msra.mxu0 0.0
        %643 = vmatprep.subr.mxu0 0.0
        %644 = vmatpush1.msra.mxu0 0.0
        %645 = vmatprep.subr.mxu0 0.0
        %646 = vmatpush1.msra.mxu0 0.0
        %647 = vmatprep.subr.mxu0 0.0
        %648 = vmatpush1.msra.mxu0 0.0
        %649 = vmatprep.subr.mxu0 0.0
        %650 = vmatpush1.msra.mxu0 0.0
        %651 = vmatprep.subr.mxu0 0.0
        %652 = vmatpush1.msra.mxu0 0.0
        %653 = vmatprep.subr.mxu0 0.0
        %654 = vmatpush1.msra.mxu0 0.0
        %655 = vmatprep.subr.mxu0 0.0
        %656 = vmatpush1.msra.mxu0 0.0
        %657 = vmatprep.subr.mxu0 0.0
        %658 = vmatpush1.msra.mxu0 0.0
        %659 = vmatprep.subr.mxu0 0.0
        %660 = vmatpush1.msra.mxu0 0.0
        %661 = vmatprep.subr.mxu0 0.0
        %662 = vmatpush1.msra.mxu0 0.0
        %663 = vmatprep.subr.mxu0 0.0
        %664 = vmatpush1.msra.mxu0 0.0
        %665 = vmatprep.subr.mxu0 0.0
        %666 = vmatpush1.msra.mxu0 0.0
        %667 = vmatprep.subr.mxu0 0.0
        %668 = vmatpush1.msra.mxu0 0.0
        %669 = vmatprep.subr.mxu0 0.0
        %670 = vmatpush1.msra.mxu0 0.0
        %671 = vmatprep.subr.mxu0 0.0
        %672 = vmatpush1.msra.mxu0 0.0
        %673 = vmatprep.subr.mxu0 0.0
        %674 = vmatpush1.msra.mxu0 0.0
        %675 = vmatprep.subr.mxu0 0.0
        %676 = vmatpush1.msra.mxu0 0.0
        %677 = vmatprep.subr.mxu0 0.0
        %678 = vmatpush1.msra.mxu0 0.0
        %679 = vmatprep.subr.mxu0 0.0
        %680 = vmatpush1.msra.mxu0 0.0
        %681 = vmatprep.subr.mxu0 0.0
        %682 = vmatpush1.msra.mxu0 0.0
        %683 = vmatprep.mubr.f32.mxu0 0.0
        %684 = vmatmul.mubr.f32.gmra.mrb[0].mxu0 %v613
        %v685 = vpop.f32.mrb[0].mxu0
        %v686 = vadd.f32 0.0, %v685
        %v687 = vpop.f32.mrb[0].mxu0
        %688 = vdwg.mxu0
        %v690 = vsel %vm611, %v604, 0
        %v693 = vsel %vm615, %v544, 0
        %695 = vmatprep.subr.mxu0 0.0
        %696 = vmatpush1.msra.mxu0 %v542
        %697 = vmatprep.subr.mxu0 0.0
        %698 = vmatpush1.msra.mxu0 %v543
        %699 = vmatprep.subr.mxu0 0.0
        %700 = vmatpush1.msra.mxu0 %v693
        %701 = vmatprep.subr.mxu0 0.0
        %702 = vmatpush1.msra.mxu0 0.0
        %703 = vmatprep.subr.mxu0 0.0
        %704 = vmatpush1.msra.mxu0 0.0
        %705 = vmatprep.subr.mxu0 0.0
        %706 = vmatpush1.msra.mxu0 0.0
        %707 = vmatprep.subr.mxu0 0.0
        %708 = vmatpush1.msra.mxu0 0.0
        %709 = vmatprep.subr.mxu0 0.0
        %710 = vmatpush1.msra.mxu0 0.0
        %711 = vmatprep.subr.mxu0 0.0
        %712 = vmatpush1.msra.mxu0 0.0
        %713 = vmatprep.subr.mxu0 0.0
        %714 = vmatpush1.msra.mxu0 0.0
        %715 = vmatprep.subr.mxu0 0.0
        %716 = vmatpush1.msra.mxu0 0.0
        %717 = vmatprep.subr.mxu0 0.0
        %718 = vmatpush1.msra.mxu0 0.0
        %719 = vmatprep.subr.mxu0 0.0
        %720 = vmatpush1.msra.mxu0 0.0
        %721 = vmatprep.subr.mxu0 0.0
        %722 = vmatpush1.msra.mxu0 0.0
        %723 = vmatprep.subr.mxu0 0.0
        %724 = vmatpush1.msra.mxu0 0.0
        %725 = vmatprep.subr.mxu0 0.0
        %726 = vmatpush1.msra.mxu0 0.0
        %727 = vmatprep.subr.mxu0 0.0
        %728 = vmatpush1.msra.mxu0 0.0
        %729 = vmatprep.subr.mxu0 0.0
        %730 = vmatpush1.msra.mxu0 0.0
        %731 = vmatprep.subr.mxu0 0.0
        %732 = vmatpush1.msra.mxu0 0.0
        %733 = vmatprep.subr.mxu0 0.0
        %734 = vmatpush1.msra.mxu0 0.0
        %735 = vmatprep.subr.mxu0 0.0
        %736 = vmatpush1.msra.mxu0 0.0
        %737 = vmatprep.subr.mxu0 0.0
        %738 = vmatpush1.msra.mxu0 0.0
        %739 = vmatprep.subr.mxu0 0.0
        %740 = vmatpush1.msra.mxu0 0.0
        %741 = vmatprep.subr.mxu0 0.0
        %742 = vmatpush1.msra.mxu0 0.0
        %743 = vmatprep.subr.mxu0 0.0
        %744 = vmatpush1.msra.mxu0 0.0
        %745 = vmatprep.subr.mxu0 0.0
        %746 = vmatpush1.msra.mxu0 0.0
        %747 = vmatprep.subr.mxu0 0.0
        %748 = vmatpush1.msra.mxu0 0.0
        %749 = vmatprep.subr.mxu0 0.0
        %750 = vmatpush1.msra.mxu0 0.0
        %751 = vmatprep.subr.mxu0 0.0
        %752 = vmatpush1.msra.mxu0 0.0
        %753 = vmatprep.subr.mxu0 0.0
        %754 = vmatpush1.msra.mxu0 0.0
        %755 = vmatprep.subr.mxu0 0.0
        %756 = vmatpush1.msra.mxu0 0.0
        %757 = vmatprep.subr.mxu0 0.0
        %758 = vmatpush1.msra.mxu0 0.0
        %759 = vmatprep.mubr.f32.mxu0 0.0
        %760 = vmatmul.mubr.f32.gmra.mrb[0].mxu0 %v690
        %v761 = vpop.f32.mrb[0].mxu0
        %v762 = vadd.f32 0.0, %v761
        %v763 = vpop.f32.mrb[0].mxu0
        %764 = vdwg.mxu0
        %v766 = vsel %vm611, %v605, 0
        %v769 = vsel %vm615, %v547, 0
        %771 = vmatprep.subr.mxu0 0.0
        %772 = vmatpush1.msra.mxu0 %v545
        %773 = vmatprep.subr.mxu0 0.0
        %774 = vmatpush1.msra.mxu0 %v546
        %775 = vmatprep.subr.mxu0 0.0
        %776 = vmatpush1.msra.mxu0 %v769
        %777 = vmatprep.subr.mxu0 0.0
        %778 = vmatpush1.msra.mxu0 0.0
        %779 = vmatprep.subr.mxu0 0.0
        %780 = vmatpush1.msra.mxu0 0.0
        %781 = vmatprep.subr.mxu0 0.0
        %782 = vmatpush1.msra.mxu0 0.0
        %783 = vmatprep.subr.mxu0 0.0
        %784 = vmatpush1.msra.mxu0 0.0
        %785 = vmatprep.subr.mxu0 0.0
        %786 = vmatpush1.msra.mxu0 0.0
        %787 = vmatprep.subr.mxu0 0.0
        %788 = vmatpush1.msra.mxu0 0.0
        %789 = vmatprep.subr.mxu0 0.0
        %790 = vmatpush1.msra.mxu0 0.0
        %791 = vmatprep.subr.mxu0 0.0
        %792 = vmatpush1.msra.mxu0 0.0
        %793 = vmatprep.subr.mxu0 0.0
        %794 = vmatpush1.msra.mxu0 0.0
        %795 = vmatprep.subr.mxu0 0.0
        %796 = vmatpush1.msra.mxu0 0.0
        %797 = vmatprep.subr.mxu0 0.0
        %798 = vmatpush1.msra.mxu0 0.0
        %799 = vmatprep.subr.mxu0 0.0
        %800 = vmatpush1.msra.mxu0 0.0
        %801 = vmatprep.subr.mxu0 0.0
        %802 = vmatpush1.msra.mxu0 0.0
        %803 = vmatprep.subr.mxu0 0.0
        %804 = vmatpush1.msra.mxu0 0.0
        %805 = vmatprep.subr.mxu0 0.0
        %806 = vmatpush1.msra.mxu0 0.0
        %807 = vmatprep.subr.mxu0 0.0
        %808 = vmatpush1.msra.mxu0 0.0
        %809 = vmatprep.subr.mxu0 0.0
        %810 = vmatpush1.msra.mxu0 0.0
        %811 = vmatprep.subr.mxu0 0.0
        %812 = vmatpush1.msra.mxu0 0.0
        %813 = vmatprep.subr.mxu0 0.0
        %814 = vmatpush1.msra.mxu0 0.0
        %815 = vmatprep.subr.mxu0 0.0
        %816 = vmatpush1.msra.mxu0 0.0
        %817 = vmatprep.subr.mxu0 0.0
        %818 = vmatpush1.msra.mxu0 0.0
        %819 = vmatprep.subr.mxu0 0.0
        %820 = vmatpush1.msra.mxu0 0.0
        %821 = vmatprep.subr.mxu0 0.0
        %822 = vmatpush1.msra.mxu0 0.0
        %823 = vmatprep.subr.mxu0 0.0
        %824 = vmatpush1.msra.mxu0 0.0
        %825 = vmatprep.subr.mxu0 0.0
        %826 = vmatpush1.msra.mxu0 0.0
        %827 = vmatprep.subr.mxu0 0.0
        %828 = vmatpush1.msra.mxu0 0.0
        %829 = vmatprep.subr.mxu0 0.0
        %830 = vmatpush1.msra.mxu0 0.0
        %831 = vmatprep.subr.mxu0 0.0
        %832 = vmatpush1.msra.mxu0 0.0
        %833 = vmatprep.subr.mxu0 0.0
        %834 = vmatpush1.msra.mxu0 0.0
        %835 = vmatprep.mubr.f32.mxu0 0.0
        %836 = vmatmul.mubr.f32.gmra.mrb[0].mxu0 %v766
        %v837 = vpop.f32.mrb[0].mxu0
        %v838 = vadd.f32 0.0, %v837
        %v839 = vpop.f32.mrb[0].mxu0
        %840 = vdwg.mxu0
        %v842 = vsel %vm611, %v606, 0
        %v845 = vsel %vm615, %v550, 0
        %847 = vmatprep.subr.mxu0 0.0
        %848 = vmatpush1.msra.mxu0 %v548
        %849 = vmatprep.subr.mxu0 0.0
        %850 = vmatpush1.msra.mxu0 %v549
        %851 = vmatprep.subr.mxu0 0.0
        %852 = vmatpush1.msra.mxu0 %v845
        %853 = vmatprep.subr.mxu0 0.0
        %854 = vmatpush1.msra.mxu0 0.0
        %855 = vmatprep.subr.mxu0 0.0
        %856 = vmatpush1.msra.mxu0 0.0
        %857 = vmatprep.subr.mxu0 0.0
        %858 = vmatpush1.msra.mxu0 0.0
        %859 = vmatprep.subr.mxu0 0.0
        %860 = vmatpush1.msra.mxu0 0.0
        %861 = vmatprep.subr.mxu0 0.0
        %862 = vmatpush1.msra.mxu0 0.0
        %863 = vmatprep.subr.mxu0 0.0
        %864 = vmatpush1.msra.mxu0 0.0
        %865 = vmatprep.subr.mxu0 0.0
        %866 = vmatpush1.msra.mxu0 0.0
        %867 = vmatprep.subr.mxu0 0.0
        %868 = vmatpush1.msra.mxu0 0.0
        %869 = vmatprep.subr.mxu0 0.0
        %870 = vmatpush1.msra.mxu0 0.0
        %871 = vmatprep.subr.mxu0 0.0
        %872 = vmatpush1.msra.mxu0 0.0
        %873 = vmatprep.subr.mxu0 0.0
        %874 = vmatpush1.msra.mxu0 0.0
        %875 = vmatprep.subr.mxu0 0.0
        %876 = vmatpush1.msra.mxu0 0.0
        %877 = vmatprep.subr.mxu0 0.0
        %878 = vmatpush1.msra.mxu0 0.0
        %879 = vmatprep.subr.mxu0 0.0
        %880 = vmatpush1.msra.mxu0 0.0
        %881 = vmatprep.subr.mxu0 0.0
        %882 = vmatpush1.msra.mxu0 0.0
        %883 = vmatprep.subr.mxu0 0.0
        %884 = vmatpush1.msra.mxu0 0.0
        %885 = vmatprep.subr.mxu0 0.0
        %886 = vmatpush1.msra.mxu0 0.0
        %887 = vmatprep.subr.mxu0 0.0
        %888 = vmatpush1.msra.mxu0 0.0
        %889 = vmatprep.subr.mxu0 0.0
        %890 = vmatpush1.msra.mxu0 0.0
        %891 = vmatprep.subr.mxu0 0.0
        %892 = vmatpush1.msra.mxu0 0.0
        %893 = vmatprep.subr.mxu0 0.0
        %894 = vmatpush1.msra.mxu0 0.0
        %895 = vmatprep.subr.mxu0 0.0
        %896 = vmatpush1.msra.mxu0 0.0
        %897 = vmatprep.subr.mxu0 0.0
        %898 = vmatpush1.msra.mxu0 0.0
        %899 = vmatprep.subr.mxu0 0.0
        %900 = vmatpush1.msra.mxu0 0.0
        %901 = vmatprep.subr.mxu0 0.0
        %902 = vmatpush1.msra.mxu0 0.0
        %903 = vmatprep.subr.mxu0 0.0
        %904 = vmatpush1.msra.mxu0 0.0
        %905 = vmatprep.subr.mxu0 0.0
        %906 = vmatpush1.msra.mxu0 0.0
        %907 = vmatprep.subr.mxu0 0.0
        %908 = vmatpush1.msra.mxu0 0.0
        %909 = vmatprep.subr.mxu0 0.0
        %910 = vmatpush1.msra.mxu0 0.0
        %911 = vmatprep.mubr.f32.mxu0 0.0
        %912 = vmatmul.mubr.f32.gmra.mrb[0].mxu0 %v842
        %v913 = vpop.f32.mrb[0].mxu0
        %v914 = vadd.f32 0.0, %v913
        %v915 = vpop.f32.mrb[0].mxu0
        %916 = vdwg.mxu0
        %v918 = vsel %vm611, %v607, 0
        %v921 = vsel %vm615, %v553, 0
        %923 = vmatprep.subr.mxu0 0.0
        %924 = vmatpush1.msra.mxu0 %v551
        %925 = vmatprep.subr.mxu0 0.0
        %926 = vmatpush1.msra.mxu0 %v552
        %927 = vmatprep.subr.mxu0 0.0
        %928 = vmatpush1.msra.mxu0 %v921
        %929 = vmatprep.subr.mxu0 0.0
        %930 = vmatpush1.msra.mxu0 0.0
        %931 = vmatprep.subr.mxu0 0.0
        %932 = vmatpush1.msra.mxu0 0.0
        %933 = vmatprep.subr.mxu0 0.0
        %934 = vmatpush1.msra.mxu0 0.0
        %935 = vmatprep.subr.mxu0 0.0
        %936 = vmatpush1.msra.mxu0 0.0
        %937 = vmatprep.subr.mxu0 0.0
        %938 = vmatpush1.msra.mxu0 0.0
        %939 = vmatprep.subr.mxu0 0.0
        %940 = vmatpush1.msra.mxu0 0.0
        %941 = vmatprep.subr.mxu0 0.0
        %942 = vmatpush1.msra.mxu0 0.0
        %943 = vmatprep.subr.mxu0 0.0
        %944 = vmatpush1.msra.mxu0 0.0
        %945 = vmatprep.subr.mxu0 0.0
        %946 = vmatpush1.msra.mxu0 0.0
        %947 = vmatprep.subr.mxu0 0.0
        %948 = vmatpush1.msra.mxu0 0.0
        %949 = vmatprep.subr.mxu0 0.0
        %950 = vmatpush1.msra.mxu0 0.0
        %951 = vmatprep.subr.mxu0 0.0
        %952 = vmatpush1.msra.mxu0 0.0
        %953 = vmatprep.subr.mxu0 0.0
        %954 = vmatpush1.msra.mxu0 0.0
        %955 = vmatprep.subr.mxu0 0.0
        %956 = vmatpush1.msra.mxu0 0.0
        %957 = vmatprep.subr.mxu0 0.0
        %958 = vmatpush1.msra.mxu0 0.0
        %959 = vmatprep.subr.mxu0 0.0
        %960 = vmatpush1.msra.mxu0 0.0
        %961 = vmatprep.subr.mxu0 0.0
        %962 = vmatpush1.msra.mxu0 0.0
        %963 = vmatprep.subr.mxu0 0.0
        %964 = vmatpush1.msra.mxu0 0.0
        %965 = vmatprep.subr.mxu0 0.0
        %966 = vmatpush1.msra.mxu0 0.0
        %967 = vmatprep.subr.mxu0 0.0
        %968 = vmatpush1.msra.mxu0 0.0
        %969 = vmatprep.subr.mxu0 0.0
        %970 = vmatpush1.msra.mxu0 0.0
        %971 = vmatprep.subr.mxu0 0.0
        %972 = vmatpush1.msra.mxu0 0.0
        %973 = vmatprep.subr.mxu0 0.0
        %974 = vmatpush1.msra.mxu0 0.0
        %975 = vmatprep.subr.mxu0 0.0
        %976 = vmatpush1.msra.mxu0 0.0
        %977 = vmatprep.subr.mxu0 0.0
        %978 = vmatpush1.msra.mxu0 0.0
        %979 = vmatprep.subr.mxu0 0.0
        %980 = vmatpush1.msra.mxu0 0.0
        %981 = vmatprep.subr.mxu0 0.0
        %982 = vmatpush1.msra.mxu0 0.0
        %983 = vmatprep.subr.mxu0 0.0
        %984 = vmatpush1.msra.mxu0 0.0
        %985 = vmatprep.subr.mxu0 0.0
        %986 = vmatpush1.msra.mxu0 0.0
        %987 = vmatprep.mubr.f32.mxu0 0.0
        %988 = vmatmul.mubr.f32.gmra.mrb[0].mxu0 %v918
        %v989 = vpop.f32.mrb[0].mxu0
        %v990 = vadd.f32 0.0, %v989
        %v991 = vpop.f32.mrb[0].mxu0
        %992 = vdwg.mxu0
        %v994 = vsel %vm611, %v608, 0
        %v997 = vsel %vm615, %v556, 0
        %999 = vmatprep.subr.mxu0 0.0
        %1000 = vmatpush1.msra.mxu0 %v554
        %1001 = vmatprep.subr.mxu0 0.0
        %1002 = vmatpush1.msra.mxu0 %v555
        %1003 = vmatprep.subr.mxu0 0.0
        %1004 = vmatpush1.msra.mxu0 %v997
        %1005 = vmatprep.subr.mxu0 0.0
        %1006 = vmatpush1.msra.mxu0 0.0
        %1007 = vmatprep.subr.mxu0 0.0
        %1008 = vmatpush1.msra.mxu0 0.0
        %1009 = vmatprep.subr.mxu0 0.0
        %1010 = vmatpush1.msra.mxu0 0.0
        %1011 = vmatprep.subr.mxu0 0.0
        %1012 = vmatpush1.msra.mxu0 0.0
        %1013 = vmatprep.subr.mxu0 0.0
        %1014 = vmatpush1.msra.mxu0 0.0
        %1015 = vmatprep.subr.mxu0 0.0
        %1016 = vmatpush1.msra.mxu0 0.0
        %1017 = vmatprep.subr.mxu0 0.0
        %1018 = vmatpush1.msra.mxu0 0.0
        %1019 = vmatprep.subr.mxu0 0.0
        %1020 = vmatpush1.msra.mxu0 0.0
        %1021 = vmatprep.subr.mxu0 0.0
        %1022 = vmatpush1.msra.mxu0 0.0
        %1023 = vmatprep.subr.mxu0 0.0
        %1024 = vmatpush1.msra.mxu0 0.0
        %1025 = vmatprep.subr.mxu0 0.0
        %1026 = vmatpush1.msra.mxu0 0.0
        %1027 = vmatprep.subr.mxu0 0.0
        %1028 = vmatpush1.msra.mxu0 0.0
        %1029 = vmatprep.subr.mxu0 0.0
        %1030 = vmatpush1.msra.mxu0 0.0
        %1031 = vmatprep.subr.mxu0 0.0
        %1032 = vmatpush1.msra.mxu0 0.0
        %1033 = vmatprep.subr.mxu0 0.0
        %1034 = vmatpush1.msra.mxu0 0.0
        %1035 = vmatprep.subr.mxu0 0.0
        %1036 = vmatpush1.msra.mxu0 0.0
        %1037 = vmatprep.subr.mxu0 0.0
        %1038 = vmatpush1.msra.mxu0 0.0
        %1039 = vmatprep.subr.mxu0 0.0
        %1040 = vmatpush1.msra.mxu0 0.0
        %1041 = vmatprep.subr.mxu0 0.0
        %1042 = vmatpush1.msra.mxu0 0.0
        %1043 = vmatprep.subr.mxu0 0.0
        %1044 = vmatpush1.msra.mxu0 0.0
        %1045 = vmatprep.subr.mxu0 0.0
        %1046 = vmatpush1.msra.mxu0 0.0
        %1047 = vmatprep.subr.mxu0 0.0
        %1048 = vmatpush1.msra.mxu0 0.0
        %1049 = vmatprep.subr.mxu0 0.0
        %1050 = vmatpush1.msra.mxu0 0.0
        %1051 = vmatprep.subr.mxu0 0.0
        %1052 = vmatpush1.msra.mxu0 0.0
        %1053 = vmatprep.subr.mxu0 0.0
        %1054 = vmatpush1.msra.mxu0 0.0
        %1055 = vmatprep.subr.mxu0 0.0
        %1056 = vmatpush1.msra.mxu0 0.0
        %1057 = vmatprep.subr.mxu0 0.0
        %1058 = vmatpush1.msra.mxu0 0.0
        %1059 = vmatprep.subr.mxu0 0.0
        %1060 = vmatpush1.msra.mxu0 0.0
        %1061 = vmatprep.subr.mxu0 0.0
        %1062 = vmatpush1.msra.mxu0 0.0
        %1063 = vmatprep.mubr.f32.mxu0 0.0
        %1064 = vmatmul.mubr.f32.gmra.mrb[0].mxu0 %v994
        %v1065 = vpop.f32.mrb[0].mxu0
        %v1066 = vadd.f32 0.0, %v1065
        %v1067 = vpop.f32.mrb[0].mxu0
        %1068 = vdwg.mxu0
        %v1070 = vsel %vm611, %v609, 0
        %v1073 = vsel %vm615, %v559, 0
        %1075 = vmatprep.subr.mxu0 0.0
        %1076 = vmatpush1.msra.mxu0 %v557
        %1077 = vmatprep.subr.mxu0 0.0
        %1078 = vmatpush1.msra.mxu0 %v558
        %1079 = vmatprep.subr.mxu0 0.0
        %1080 = vmatpush1.msra.mxu0 %v1073
        %1081 = vmatprep.subr.mxu0 0.0
        %1082 = vmatpush1.msra.mxu0 0.0
        %1083 = vmatprep.subr.mxu0 0.0
        %1084 = vmatpush1.msra.mxu0 0.0
        %1085 = vmatprep.subr.mxu0 0.0
        %1086 = vmatpush1.msra.mxu0 0.0
        %1087 = vmatprep.subr.mxu0 0.0
        %1088 = vmatpush1.msra.mxu0 0.0
        %1089 = vmatprep.subr.mxu0 0.0
        %1090 = vmatpush1.msra.mxu0 0.0
        %1091 = vmatprep.subr.mxu0 0.0
        %1092 = vmatpush1.msra.mxu0 0.0
        %1093 = vmatprep.subr.mxu0 0.0
        %1094 = vmatpush1.msra.mxu0 0.0
        %1095 = vmatprep.subr.mxu0 0.0
        %1096 = vmatpush1.msra.mxu0 0.0
        %1097 = vmatprep.subr.mxu0 0.0
        %1098 = vmatpush1.msra.mxu0 0.0
        %1099 = vmatprep.subr.mxu0 0.0
        %1100 = vmatpush1.msra.mxu0 0.0
        %1101 = vmatprep.subr.mxu0 0.0
        %1102 = vmatpush1.msra.mxu0 0.0
        %1103 = vmatprep.subr.mxu0 0.0
        %1104 = vmatpush1.msra.mxu0 0.0
        %1105 = vmatprep.subr.mxu0 0.0
        %1106 = vmatpush1.msra.mxu0 0.0
        %1107 = vmatprep.subr.mxu0 0.0
        %1108 = vmatpush1.msra.mxu0 0.0
        %1109 = vmatprep.subr.mxu0 0.0
        %1110 = vmatpush1.msra.mxu0 0.0
        %1111 = vmatprep.subr.mxu0 0.0
        %1112 = vmatpush1.msra.mxu0 0.0
        %1113 = vmatprep.subr.mxu0 0.0
        %1114 = vmatpush1.msra.mxu0 0.0
        %1115 = vmatprep.subr.mxu0 0.0
        %1116 = vmatpush1.msra.mxu0 0.0
        %1117 = vmatprep.subr.mxu0 0.0
        %1118 = vmatpush1.msra.mxu0 0.0
        %1119 = vmatprep.subr.mxu0 0.0
        %1120 = vmatpush1.msra.mxu0 0.0
        %1121 = vmatprep.subr.mxu0 0.0
        %1122 = vmatpush1.msra.mxu0 0.0
        %1123 = vmatprep.subr.mxu0 0.0
        %1124 = vmatpush1.msra.mxu0 0.0
        %1125 = vmatprep.subr.mxu0 0.0
        %1126 = vmatpush1.msra.mxu0 0.0
        %1127 = vmatprep.subr.mxu0 0.0
        %1128 = vmatpush1.msra.mxu0 0.0
        %1129 = vmatprep.subr.mxu0 0.0
        %1130 = vmatpush1.msra.mxu0 0.0
        %1131 = vmatprep.subr.mxu0 0.0
        %1132 = vmatpush1.msra.mxu0 0.0
        %1133 = vmatprep.subr.mxu0 0.0
        %1134 = vmatpush1.msra.mxu0 0.0
        %1135 = vmatprep.subr.mxu0 0.0
        %1136 = vmatpush1.msra.mxu0 0.0
        %1137 = vmatprep.subr.mxu0 0.0
        %1138 = vmatpush1.msra.mxu0 0.0
        %1139 = vmatprep.mubr.f32.mxu0 0.0
        %1140 = vmatmul.mubr.f32.gmra.mrb[0].mxu0 %v1070
        %v1141 = vpop.f32.mrb[0].mxu0
        %v1142 = vadd.f32 0.0, %v1141
        %v1143 = vpop.f32.mrb[0].mxu0
        %1144 = vdwg.mxu0
        %v1146 = vsel %vm611, %v610, 0
        %v1149 = vsel %vm615, %v562, 0
        %1151 = vmatprep.subr.mxu0 0.0
        %1152 = vmatpush1.msra.mxu0 %v560
        %1153 = vmatprep.subr.mxu0 0.0
        %1154 = vmatpush1.msra.mxu0 %v561
        %1155 = vmatprep.subr.mxu0 0.0
        %1156 = vmatpush1.msra.mxu0 %v1149
        %1157 = vmatprep.subr.mxu0 0.0
        %1158 = vmatpush1.msra.mxu0 0.0
        %1159 = vmatprep.subr.mxu0 0.0
        %1160 = vmatpush1.msra.mxu0 0.0
        %1161 = vmatprep.subr.mxu0 0.0
        %1162 = vmatpush1.msra.mxu0 0.0
        %1163 = vmatprep.subr.mxu0 0.0
        %1164 = vmatpush1.msra.mxu0 0.0
        %1165 = vmatprep.subr.mxu0 0.0
        %1166 = vmatpush1.msra.mxu0 0.0
        %1167 = vmatprep.subr.mxu0 0.0
        %1168 = vmatpush1.msra.mxu0 0.0
        %1169 = vmatprep.subr.mxu0 0.0
        %1170 = vmatpush1.msra.mxu0 0.0
        %1171 = vmatprep.subr.mxu0 0.0
        %1172 = vmatpush1.msra.mxu0 0.0
        %1173 = vmatprep.subr.mxu0 0.0
        %1174 = vmatpush1.msra.mxu0 0.0
        %1175 = vmatprep.subr.mxu0 0.0
        %1176 = vmatpush1.msra.mxu0 0.0
        %1177 = vmatprep.subr.mxu0 0.0
        %1178 = vmatpush1.msra.mxu0 0.0
        %1179 = vmatprep.subr.mxu0 0.0
        %1180 = vmatpush1.msra.mxu0 0.0
        %1181 = vmatprep.subr.mxu0 0.0
        %1182 = vmatpush1.msra.mxu0 0.0
        %1183 = vmatprep.subr.mxu0 0.0
        %1184 = vmatpush1.msra.mxu0 0.0
        %1185 = vmatprep.subr.mxu0 0.0
        %1186 = vmatpush1.msra.mxu0 0.0
        %1187 = vmatprep.subr.mxu0 0.0
        %1188 = vmatpush1.msra.mxu0 0.0
        %1189 = vmatprep.subr.mxu0 0.0
        %1190 = vmatpush1.msra.mxu0 0.0
        %1191 = vmatprep.subr.mxu0 0.0
        %1192 = vmatpush1.msra.mxu0 0.0
        %1193 = vmatprep.subr.mxu0 0.0
        %1194 = vmatpush1.msra.mxu0 0.0
        %1195 = vmatprep.subr.mxu0 0.0
        %1196 = vmatpush1.msra.mxu0 0.0
        %1197 = vmatprep.subr.mxu0 0.0
        %1198 = vmatpush1.msra.mxu0 0.0
        %1199 = vmatprep.subr.mxu0 0.0
        %1200 = vmatpush1.msra.mxu0 0.0
        %1201 = vmatprep.subr.mxu0 0.0
        %1202 = vmatpush1.msra.mxu0 0.0
        %1203 = vmatprep.subr.mxu0 0.0
        %1204 = vmatpush1.msra.mxu0 0.0
        %1205 = vmatprep.subr.mxu0 0.0
        %1206 = vmatpush1.msra.mxu0 0.0
        %1207 = vmatprep.subr.mxu0 0.0
        %1208 = vmatpush1.msra.mxu0 0.0
        %1209 = vmatprep.subr.mxu0 0.0
        %1210 = vmatpush1.msra.mxu0 0.0
        %1211 = vmatprep.subr.mxu0 0.0
        %1212 = vmatpush1.msra.mxu0 0.0
        %1213 = vmatprep.subr.mxu0 0.0
        %1214 = vmatpush1.msra.mxu0 0.0
        %1215 = vmatprep.mubr.f32.mxu0 0.0
        %1216 = vmatmul.mubr.f32.gmra.mrb[0].mxu0 %v1146
        %v1217 = vpop.f32.mrb[0].mxu0
        %v1218 = vadd.f32 0.0, %v1217
        %v1219 = vpop.f32.mrb[0].mxu0
        %1220 = vdwg.mxu0
        %v1221 = vstv %s528
        %v1222 = vmul.f32 %v1221, %v686
        %v1223 = vmul.f32 %v1221, %v762
        %v1224 = vmul.f32 %v1221, %v838
        %v1225 = vmul.f32 %v1221, %v914
        %v1226 = vmul.f32 %v1221, %v990
        %v1227 = vmul.f32 %v1221, %v1066
        %v1228 = vmul.f32 %v1221, %v1142
        %v1229 = vmul.f32 %v1221, %v1218
        %v1230 = vsub.f32 %v563, %v1222
        %v1231 = vsub.f32 %v564, %v1223
        %v1232 = vsub.f32 %v565, %v1224
        %v1233 = vsub.f32 %v566, %v1225
        %v1234 = vsub.f32 %v567, %v1226
        %v1235 = vsub.f32 %v568, %v1227
        %v1236 = vsub.f32 %v569, %v1228
        %v1237 = vsub.f32 %v570, %v1229
        %v1238 = vmax.f32 %v1230, 0.0
        %v1239 = vmax.f32 %v1231, 0.0
        %v1240 = vmax.f32 %v1232, 0.0
        %v1241 = vmax.f32 %v1233, 0.0
        %v1242 = vmax.f32 %v1234, 0.0
        %v1243 = vmax.f32 %v1235, 0.0
        %v1244 = vmax.f32 %v1236, 0.0
        %v1245 = vmax.f32 %v1237, 0.0
        %vm1246 = vcmask 811008
        %1247 = vst.msk [vmem:[%s512] sm:$0x1] %vm1246, %v1238
        %1248 = vst.msk [vmem:[%s512 + $0x1] sm:$0x1] %vm1246, %v1239
        %1249 = vst.msk [vmem:[%s512 + $0x2] sm:$0x1] %vm1246, %v1240
        %1250 = vst.msk [vmem:[%s512 + $0x3] sm:$0x1] %vm1246, %v1241
        %1251 = vst.msk [vmem:[%s512 + $0x4] sm:$0x1] %vm1246, %v1242
        %1252 = vst.msk [vmem:[%s512 + $0x5] sm:$0x1] %vm1246, %v1243
        %1253 = vst.msk [vmem:[%s512 + $0x6] sm:$0x1] %vm1246, %v1244
        %1254 = vst.msk [vmem:[%s512 + $0x7] sm:$0x1] %vm1246, %v1245
        %v1256 = vlaneseq
        %v1257 = vshrl.u32 %v1256, 7
        %v1258 = vsub.s32 0, %v1257
        %v1259 = vrot.slane %v1238, %v1258
        %v1261 = vmul.f32 %v539, %v1259
        %v1262 = vmul.f32 %v540, %v1259
        %v1263 = vmul.f32 %v541, %v1259
        %vm1264 = vcmask 818176
        %v1265 = vsel %vm1264, %v1261, 0.0
        %1266 = vadd.xlane.f32.xlu0 %v1265
        %v1267 = vpop.xlane.xlu0 %1266
        %v1268 = vsel %vm1264, %v1262, 0.0
        %1269 = vadd.xlane.f32.xlu0 %v1268
        %v1270 = vpop.xlane.xlu0 %1269
        %vm1271 = vcmask 814080
        %v1272 = vsel %vm1271, %v1263, 0.0
        %1273 = vadd.xlane.f32.xlu0 %v1272
        %v1274 = vpop.xlane.xlu0 %1273
        %v1276 = vlaneseq
        %v1277 = vshrl.u32 %v1276, 7
        %v1278 = vsub.s32 0, %v1277
        %v1279 = vrot.slane %v1239, %v1278
        %v1281 = vmul.f32 %v542, %v1279
        %v1282 = vmul.f32 %v543, %v1279
        %v1283 = vmul.f32 %v544, %v1279
        %v1284 = vsel %vm1264, %v1281, 0.0
        %1285 = vadd.xlane.f32.xlu0 %v1284
        %v1286 = vpop.xlane.xlu0 %1285
        %v1287 = vsel %vm1264, %v1282, 0.0
        %1288 = vadd.xlane.f32.xlu0 %v1287
        %v1289 = vpop.xlane.xlu0 %1288
        %v1290 = vsel %vm1271, %v1283, 0.0
        %1291 = vadd.xlane.f32.xlu0 %v1290
        %v1292 = vpop.xlane.xlu0 %1291
        %v1294 = vlaneseq
        %v1295 = vshrl.u32 %v1294, 7
        %v1296 = vsub.s32 0, %v1295
        %v1297 = vrot.slane %v1240, %v1296
        %v1299 = vmul.f32 %v545, %v1297
        %v1300 = vmul.f32 %v546, %v1297
        %v1301 = vmul.f32 %v547, %v1297
        %v1302 = vsel %vm1264, %v1299, 0.0
        %1303 = vadd.xlane.f32.xlu0 %v1302
        %v1304 = vpop.xlane.xlu0 %1303
        %v1305 = vsel %vm1264, %v1300, 0.0
        %1306 = vadd.xlane.f32.xlu0 %v1305
        %v1307 = vpop.xlane.xlu0 %1306
        %v1308 = vsel %vm1271, %v1301, 0.0
        %1309 = vadd.xlane.f32.xlu0 %v1308
        %v1310 = vpop.xlane.xlu0 %1309
        %v1312 = vlaneseq
        %v1313 = vshrl.u32 %v1312, 7
        %v1314 = vsub.s32 0, %v1313
        %v1315 = vrot.slane %v1241, %v1314
        %v1317 = vmul.f32 %v548, %v1315
        %v1318 = vmul.f32 %v549, %v1315
        %v1319 = vmul.f32 %v550, %v1315
        %v1320 = vsel %vm1264, %v1317, 0.0
        %1321 = vadd.xlane.f32.xlu0 %v1320
        %v1322 = vpop.xlane.xlu0 %1321
        %v1323 = vsel %vm1264, %v1318, 0.0
        %1324 = vadd.xlane.f32.xlu0 %v1323
        %v1325 = vpop.xlane.xlu0 %1324
        %v1326 = vsel %vm1271, %v1319, 0.0
        %1327 = vadd.xlane.f32.xlu0 %v1326
        %v1328 = vpop.xlane.xlu0 %1327
        %v1330 = vlaneseq
        %v1331 = vshrl.u32 %v1330, 7
        %v1332 = vsub.s32 0, %v1331
        %v1333 = vrot.slane %v1242, %v1332
        %v1335 = vmul.f32 %v551, %v1333
        %v1336 = vmul.f32 %v552, %v1333
        %v1337 = vmul.f32 %v553, %v1333
        %v1338 = vsel %vm1264, %v1335, 0.0
        %1339 = vadd.xlane.f32.xlu0 %v1338
        %v1340 = vpop.xlane.xlu0 %1339
        %v1341 = vsel %vm1264, %v1336, 0.0
        %1342 = vadd.xlane.f32.xlu0 %v1341
        %v1343 = vpop.xlane.xlu0 %1342
        %v1344 = vsel %vm1271, %v1337, 0.0
        %1345 = vadd.xlane.f32.xlu0 %v1344
        %v1346 = vpop.xlane.xlu0 %1345
        %v1348 = vlaneseq
        %v1349 = vshrl.u32 %v1348, 7
        %v1350 = vsub.s32 0, %v1349
        %v1351 = vrot.slane %v1243, %v1350
        %v1353 = vmul.f32 %v554, %v1351
        %v1354 = vmul.f32 %v555, %v1351
        %v1355 = vmul.f32 %v556, %v1351
        %v1356 = vsel %vm1264, %v1353, 0.0
        %1357 = vadd.xlane.f32.xlu0 %v1356
        %v1358 = vpop.xlane.xlu0 %1357
        %v1359 = vsel %vm1264, %v1354, 0.0
        %1360 = vadd.xlane.f32.xlu0 %v1359
        %v1361 = vpop.xlane.xlu0 %1360
        %v1362 = vsel %vm1271, %v1355, 0.0
        %1363 = vadd.xlane.f32.xlu0 %v1362
        %v1364 = vpop.xlane.xlu0 %1363
        %v1366 = vlaneseq
        %v1367 = vshrl.u32 %v1366, 7
        %v1368 = vsub.s32 0, %v1367
        %v1369 = vrot.slane %v1244, %v1368
        %v1371 = vmul.f32 %v557, %v1369
        %v1372 = vmul.f32 %v558, %v1369
        %v1373 = vmul.f32 %v559, %v1369
        %v1374 = vsel %vm1264, %v1371, 0.0
        %1375 = vadd.xlane.f32.xlu0 %v1374
        %v1376 = vpop.xlane.xlu0 %1375
        %v1377 = vsel %vm1264, %v1372, 0.0
        %1378 = vadd.xlane.f32.xlu0 %v1377
        %v1379 = vpop.xlane.xlu0 %1378
        %v1380 = vsel %vm1271, %v1373, 0.0
        %1381 = vadd.xlane.f32.xlu0 %v1380
        %v1382 = vpop.xlane.xlu0 %1381
        %v1384 = vlaneseq
        %v1385 = vshrl.u32 %v1384, 7
        %v1386 = vsub.s32 0, %v1385
        %v1387 = vrot.slane %v1245, %v1386
        %v1389 = vmul.f32 %v560, %v1387
        %v1390 = vmul.f32 %v561, %v1387
        %v1391 = vmul.f32 %v562, %v1387
        %v1392 = vsel %vm1264, %v1389, 0.0
        %1393 = vadd.xlane.f32.xlu0 %v1392
        %v1394 = vpop.xlane.xlu0 %1393
        %v1395 = vsel %vm1264, %v1390, 0.0
        %1396 = vadd.xlane.f32.xlu0 %v1395
        %v1397 = vpop.xlane.xlu0 %1396
        %v1398 = vsel %vm1271, %v1391, 0.0
        %1399 = vadd.xlane.f32.xlu0 %v1398
        %v1400 = vpop.xlane.xlu0 %1399
        %1401 = vxpose.xlu0.b32.start [1/16] %v1267, 128
        %1402 = vxpose.xlu0.b32.cont [2/16] %v1270, 128
        %1403 = vxpose.xlu0.b32.cont [3/16] %v1274, 128
        %1404 = vxpose.xlu0.b32.cont [4/16] 0.0, 128
        %1405 = vxpose.xlu0.b32.cont [5/16] 0.0, 128
        %1406 = vxpose.xlu0.b32.cont [6/16] 0.0, 128
        %1407 = vxpose.xlu0.b32.cont [7/16] 0.0, 128
        %1408 = vxpose.xlu0.b32.cont [8/16] 0.0, 128
        %1409 = vxpose.xlu0.b32.cont [9/16] 0.0, 128
        %1410 = vxpose.xlu0.b32.cont [10/16] 0.0, 128
        %1411 = vxpose.xlu0.b32.cont [11/16] 0.0, 128
        %1412 = vxpose.xlu0.b32.cont [12/16] 0.0, 128
        %1413 = vxpose.xlu0.b32.cont [13/16] 0.0, 128
        %1414 = vxpose.xlu0.b32.cont [14/16] 0.0, 128
        %1415 = vxpose.xlu0.b32.cont [15/16] 0.0, 128
        %1416 = vxpose.xlu0.b32.end [16/16] 0.0, 128
        %v1417 = vpop.trf.xlu0
        %v1418 = vpop.trf.xlu0
        %v1419 = vpop.trf.xlu0
        %v1420 = vpop.trf.xlu0
        %v1421 = vpop.trf.xlu0
        %v1422 = vpop.trf.xlu0
        %v1423 = vpop.trf.xlu0
        %v1424 = vpop.trf.xlu0
        %v1425 = vpop.trf.xlu0
        %v1426 = vpop.trf.xlu0
        %v1427 = vpop.trf.xlu0
        %v1428 = vpop.trf.xlu0
        %v1429 = vpop.trf.xlu0
        %v1430 = vpop.trf.xlu0
        %v1431 = vpop.trf.xlu0
        %v1432 = vpop.trf.xlu0
        %1433 = vxpose.xlu0.b32.start [1/16] %v1286, 128
        %1434 = vxpose.xlu0.b32.cont [2/16] %v1289, 128
        %1435 = vxpose.xlu0.b32.cont [3/16] %v1292, 128
        %1436 = vxpose.xlu0.b32.cont [4/16] 0.0, 128
        %1437 = vxpose.xlu0.b32.cont [5/16] 0.0, 128
        %1438 = vxpose.xlu0.b32.cont [6/16] 0.0, 128
        %1439 = vxpose.xlu0.b32.cont [7/16] 0.0, 128
        %1440 = vxpose.xlu0.b32.cont [8/16] 0.0, 128
        %1441 = vxpose.xlu0.b32.cont [9/16] 0.0, 128
        %1442 = vxpose.xlu0.b32.cont [10/16] 0.0, 128
        %1443 = vxpose.xlu0.b32.cont [11/16] 0.0, 128
        %1444 = vxpose.xlu0.b32.cont [12/16] 0.0, 128
        %1445 = vxpose.xlu0.b32.cont [13/16] 0.0, 128
        %1446 = vxpose.xlu0.b32.cont [14/16] 0.0, 128
        %1447 = vxpose.xlu0.b32.cont [15/16] 0.0, 128
        %1448 = vxpose.xlu0.b32.end [16/16] 0.0, 128
        %v1449 = vpop.trf.xlu0
        %v1450 = vpop.trf.xlu0
        %v1451 = vpop.trf.xlu0
        %v1452 = vpop.trf.xlu0
        %v1453 = vpop.trf.xlu0
        %v1454 = vpop.trf.xlu0
        %v1455 = vpop.trf.xlu0
        %v1456 = vpop.trf.xlu0
        %v1457 = vpop.trf.xlu0
        %v1458 = vpop.trf.xlu0
        %v1459 = vpop.trf.xlu0
        %v1460 = vpop.trf.xlu0
        %v1461 = vpop.trf.xlu0
        %v1462 = vpop.trf.xlu0
        %v1463 = vpop.trf.xlu0
        %v1464 = vpop.trf.xlu0
        %1465 = vxpose.xlu0.b32.start [1/16] %v1304, 128
        %1466 = vxpose.xlu0.b32.cont [2/16] %v1307, 128
        %1467 = vxpose.xlu0.b32.cont [3/16] %v1310, 128
        %1468 = vxpose.xlu0.b32.cont [4/16] 0.0, 128
        %1469 = vxpose.xlu0.b32.cont [5/16] 0.0, 128
        %1470 = vxpose.xlu0.b32.cont [6/16] 0.0, 128
        %1471 = vxpose.xlu0.b32.cont [7/16] 0.0, 128
        %1472 = vxpose.xlu0.b32.cont [8/16] 0.0, 128
        %1473 = vxpose.xlu0.b32.cont [9/16] 0.0, 128
        %1474 = vxpose.xlu0.b32.cont [10/16] 0.0, 128
        %1475 = vxpose.xlu0.b32.cont [11/16] 0.0, 128
        %1476 = vxpose.xlu0.b32.cont [12/16] 0.0, 128
        %1477 = vxpose.xlu0.b32.cont [13/16] 0.0, 128
        %1478 = vxpose.xlu0.b32.cont [14/16] 0.0, 128
        %1479 = vxpose.xlu0.b32.cont [15/16] 0.0, 128
        %1480 = vxpose.xlu0.b32.end [16/16] 0.0, 128
        %v1481 = vpop.trf.xlu0
        %v1482 = vpop.trf.xlu0
        %v1483 = vpop.trf.xlu0
        %v1484 = vpop.trf.xlu0
        %v1485 = vpop.trf.xlu0
        %v1486 = vpop.trf.xlu0
        %v1487 = vpop.trf.xlu0
        %v1488 = vpop.trf.xlu0
        %v1489 = vpop.trf.xlu0
        %v1490 = vpop.trf.xlu0
        %v1491 = vpop.trf.xlu0
        %v1492 = vpop.trf.xlu0
        %v1493 = vpop.trf.xlu0
        %v1494 = vpop.trf.xlu0
        %v1495 = vpop.trf.xlu0
        %v1496 = vpop.trf.xlu0
        %1497 = vxpose.xlu0.b32.start [1/16] %v1322, 128
        %1498 = vxpose.xlu0.b32.cont [2/16] %v1325, 128
        %1499 = vxpose.xlu0.b32.cont [3/16] %v1328, 128
        %1500 = vxpose.xlu0.b32.cont [4/16] 0.0, 128
        %1501 = vxpose.xlu0.b32.cont [5/16] 0.0, 128
        %1502 = vxpose.xlu0.b32.cont [6/16] 0.0, 128
        %1503 = vxpose.xlu0.b32.cont [7/16] 0.0, 128
        %1504 = vxpose.xlu0.b32.cont [8/16] 0.0, 128
        %1505 = vxpose.xlu0.b32.cont [9/16] 0.0, 128
        %1506 = vxpose.xlu0.b32.cont [10/16] 0.0, 128
        %1507 = vxpose.xlu0.b32.cont [11/16] 0.0, 128
        %1508 = vxpose.xlu0.b32.cont [12/16] 0.0, 128
        %1509 = vxpose.xlu0.b32.cont [13/16] 0.0, 128
        %1510 = vxpose.xlu0.b32.cont [14/16] 0.0, 128
        %1511 = vxpose.xlu0.b32.cont [15/16] 0.0, 128
        %1512 = vxpose.xlu0.b32.end [16/16] 0.0, 128
        %v1513 = vpop.trf.xlu0
        %v1514 = vpop.trf.xlu0
        %v1515 = vpop.trf.xlu0
        %v1516 = vpop.trf.xlu0
        %v1517 = vpop.trf.xlu0
        %v1518 = vpop.trf.xlu0
        %v1519 = vpop.trf.xlu0
        %v1520 = vpop.trf.xlu0
        %v1521 = vpop.trf.xlu0
        %v1522 = vpop.trf.xlu0
        %v1523 = vpop.trf.xlu0
        %v1524 = vpop.trf.xlu0
        %v1525 = vpop.trf.xlu0
        %v1526 = vpop.trf.xlu0
        %v1527 = vpop.trf.xlu0
        %v1528 = vpop.trf.xlu0
        %1529 = vxpose.xlu0.b32.start [1/16] %v1340, 128
        %1530 = vxpose.xlu0.b32.cont [2/16] %v1343, 128
        %1531 = vxpose.xlu0.b32.cont [3/16] %v1346, 128
        %1532 = vxpose.xlu0.b32.cont [4/16] 0.0, 128
        %1533 = vxpose.xlu0.b32.cont [5/16] 0.0, 128
        %1534 = vxpose.xlu0.b32.cont [6/16] 0.0, 128
        %1535 = vxpose.xlu0.b32.cont [7/16] 0.0, 128
        %1536 = vxpose.xlu0.b32.cont [8/16] 0.0, 128
        %1537 = vxpose.xlu0.b32.cont [9/16] 0.0, 128
        %1538 = vxpose.xlu0.b32.cont [10/16] 0.0, 128
        %1539 = vxpose.xlu0.b32.cont [11/16] 0.0, 128
        %1540 = vxpose.xlu0.b32.cont [12/16] 0.0, 128
        %1541 = vxpose.xlu0.b32.cont [13/16] 0.0, 128
        %1542 = vxpose.xlu0.b32.cont [14/16] 0.0, 128
        %1543 = vxpose.xlu0.b32.cont [15/16] 0.0, 128
        %1544 = vxpose.xlu0.b32.end [16/16] 0.0, 128
        %v1545 = vpop.trf.xlu0
        %v1546 = vpop.trf.xlu0
        %v1547 = vpop.trf.xlu0
        %v1548 = vpop.trf.xlu0
        %v1549 = vpop.trf.xlu0
        %v1550 = vpop.trf.xlu0
        %v1551 = vpop.trf.xlu0
        %v1552 = vpop.trf.xlu0
        %v1553 = vpop.trf.xlu0
        %v1554 = vpop.trf.xlu0
        %v1555 = vpop.trf.xlu0
        %v1556 = vpop.trf.xlu0
        %v1557 = vpop.trf.xlu0
        %v1558 = vpop.trf.xlu0
        %v1559 = vpop.trf.xlu0
        %v1560 = vpop.trf.xlu0
        %1561 = vxpose.xlu0.b32.start [1/16] %v1358, 128
        %1562 = vxpose.xlu0.b32.cont [2/16] %v1361, 128
        %1563 = vxpose.xlu0.b32.cont [3/16] %v1364, 128
        %1564 = vxpose.xlu0.b32.cont [4/16] 0.0, 128
        %1565 = vxpose.xlu0.b32.cont [5/16] 0.0, 128
        %1566 = vxpose.xlu0.b32.cont [6/16] 0.0, 128
        %1567 = vxpose.xlu0.b32.cont [7/16] 0.0, 128
        %1568 = vxpose.xlu0.b32.cont [8/16] 0.0, 128
        %1569 = vxpose.xlu0.b32.cont [9/16] 0.0, 128
        %1570 = vxpose.xlu0.b32.cont [10/16] 0.0, 128
        %1571 = vxpose.xlu0.b32.cont [11/16] 0.0, 128
        %1572 = vxpose.xlu0.b32.cont [12/16] 0.0, 128
        %1573 = vxpose.xlu0.b32.cont [13/16] 0.0, 128
        %1574 = vxpose.xlu0.b32.cont [14/16] 0.0, 128
        %1575 = vxpose.xlu0.b32.cont [15/16] 0.0, 128
        %1576 = vxpose.xlu0.b32.end [16/16] 0.0, 128
        %v1577 = vpop.trf.xlu0
        %v1578 = vpop.trf.xlu0
        %v1579 = vpop.trf.xlu0
        %v1580 = vpop.trf.xlu0
        %v1581 = vpop.trf.xlu0
        %v1582 = vpop.trf.xlu0
        %v1583 = vpop.trf.xlu0
        %v1584 = vpop.trf.xlu0
        %v1585 = vpop.trf.xlu0
        %v1586 = vpop.trf.xlu0
        %v1587 = vpop.trf.xlu0
        %v1588 = vpop.trf.xlu0
        %v1589 = vpop.trf.xlu0
        %v1590 = vpop.trf.xlu0
        %v1591 = vpop.trf.xlu0
        %v1592 = vpop.trf.xlu0
        %1593 = vxpose.xlu0.b32.start [1/16] %v1376, 128
        %1594 = vxpose.xlu0.b32.cont [2/16] %v1379, 128
        %1595 = vxpose.xlu0.b32.cont [3/16] %v1382, 128
        %1596 = vxpose.xlu0.b32.cont [4/16] 0.0, 128
        %1597 = vxpose.xlu0.b32.cont [5/16] 0.0, 128
        %1598 = vxpose.xlu0.b32.cont [6/16] 0.0, 128
        %1599 = vxpose.xlu0.b32.cont [7/16] 0.0, 128
        %1600 = vxpose.xlu0.b32.cont [8/16] 0.0, 128
        %1601 = vxpose.xlu0.b32.cont [9/16] 0.0, 128
        %1602 = vxpose.xlu0.b32.cont [10/16] 0.0, 128
        %1603 = vxpose.xlu0.b32.cont [11/16] 0.0, 128
        %1604 = vxpose.xlu0.b32.cont [12/16] 0.0, 128
        %1605 = vxpose.xlu0.b32.cont [13/16] 0.0, 128
        %1606 = vxpose.xlu0.b32.cont [14/16] 0.0, 128
        %1607 = vxpose.xlu0.b32.cont [15/16] 0.0, 128
        %1608 = vxpose.xlu0.b32.end [16/16] 0.0, 128
        %v1609 = vpop.trf.xlu0
        %v1610 = vpop.trf.xlu0
        %v1611 = vpop.trf.xlu0
        %v1612 = vpop.trf.xlu0
        %v1613 = vpop.trf.xlu0
        %v1614 = vpop.trf.xlu0
        %v1615 = vpop.trf.xlu0
        %v1616 = vpop.trf.xlu0
        %v1617 = vpop.trf.xlu0
        %v1618 = vpop.trf.xlu0
        %v1619 = vpop.trf.xlu0
        %v1620 = vpop.trf.xlu0
        %v1621 = vpop.trf.xlu0
        %v1622 = vpop.trf.xlu0
        %v1623 = vpop.trf.xlu0
        %v1624 = vpop.trf.xlu0
        %1625 = vxpose.xlu0.b32.start [1/16] %v1394, 128
        %1626 = vxpose.xlu0.b32.cont [2/16] %v1397, 128
        %1627 = vxpose.xlu0.b32.cont [3/16] %v1400, 128
        %1628 = vxpose.xlu0.b32.cont [4/16] 0.0, 128
        %1629 = vxpose.xlu0.b32.cont [5/16] 0.0, 128
        %1630 = vxpose.xlu0.b32.cont [6/16] 0.0, 128
        %1631 = vxpose.xlu0.b32.cont [7/16] 0.0, 128
        %1632 = vxpose.xlu0.b32.cont [8/16] 0.0, 128
        %1633 = vxpose.xlu0.b32.cont [9/16] 0.0, 128
        %1634 = vxpose.xlu0.b32.cont [10/16] 0.0, 128
        %1635 = vxpose.xlu0.b32.cont [11/16] 0.0, 128
        %1636 = vxpose.xlu0.b32.cont [12/16] 0.0, 128
        %1637 = vxpose.xlu0.b32.cont [13/16] 0.0, 128
        %1638 = vxpose.xlu0.b32.cont [14/16] 0.0, 128
        %1639 = vxpose.xlu0.b32.cont [15/16] 0.0, 128
        %1640 = vxpose.xlu0.b32.end [16/16] 0.0, 128
        %v1641 = vpop.trf.xlu0
        %v1642 = vpop.trf.xlu0
        %v1643 = vpop.trf.xlu0
        %v1644 = vpop.trf.xlu0
        %v1645 = vpop.trf.xlu0
        %v1646 = vpop.trf.xlu0
        %v1647 = vpop.trf.xlu0
        %v1648 = vpop.trf.xlu0
        %v1649 = vpop.trf.xlu0
        %v1650 = vpop.trf.xlu0
        %v1651 = vpop.trf.xlu0
        %v1652 = vpop.trf.xlu0
        %v1653 = vpop.trf.xlu0
        %v1654 = vpop.trf.xlu0
        %v1655 = vpop.trf.xlu0
        %v1656 = vpop.trf.xlu0
        %v1657 = vstv %s537
        %v1658 = vmul.f32 %v1657, %v571
        %v1659 = vmul.f32 %v1657, %v572
        %v1660 = vmul.f32 %v1657, %v573
        %v1661 = vmul.f32 %v1657, %v574
        %v1662 = vmul.f32 %v1657, %v575
        %v1663 = vmul.f32 %v1657, %v576
        %v1664 = vmul.f32 %v1657, %v577
        %v1665 = vmul.f32 %v1657, %v578
        %v1666 = vsub.f32 %v1417, %v587
        %v1667 = vsub.f32 %v1449, %v588
        %v1668 = vsub.f32 %v1481, %v589
        %v1669 = vsub.f32 %v1513, %v590
        %v1670 = vsub.f32 %v1545, %v591
        %v1671 = vsub.f32 %v1577, %v592
        %v1672 = vsub.f32 %v1609, %v593
        %v1673 = vsub.f32 %v1641, %v594
        %v1674 = vstv %s538
        %v1675 = vmul.f32 %v1674, %v1666
        %v1676 = vmul.f32 %v1674, %v1667
        %v1677 = vmul.f32 %v1674, %v1668
        %v1678 = vmul.f32 %v1674, %v1669
        %v1679 = vmul.f32 %v1674, %v1670
        %v1680 = vmul.f32 %v1674, %v1671
        %v1681 = vmul.f32 %v1674, %v1672
        %v1682 = vmul.f32 %v1674, %v1673
        %v1683 = vadd.f32 %v1658, %v1675
        %v1684 = vadd.f32 %v1659, %v1676
        %v1685 = vadd.f32 %v1660, %v1677
        %v1686 = vadd.f32 %v1661, %v1678
        %v1687 = vadd.f32 %v1662, %v1679
        %v1688 = vadd.f32 %v1663, %v1680
        %v1689 = vadd.f32 %v1664, %v1681
        %v1690 = vadd.f32 %v1665, %v1682
        %vm1691 = vcmask 155648
        %1692 = vst.msk [vmem:[%s519] sm:$0x1] %vm1691, %v1683
        %1693 = vst.msk [vmem:[%s519 + $0x1] sm:$0x1] %vm1691, %v1684
        %1694 = vst.msk [vmem:[%s519 + $0x2] sm:$0x1] %vm1691, %v1685
        %1695 = vst.msk [vmem:[%s519 + $0x3] sm:$0x1] %vm1691, %v1686
        %1696 = vst.msk [vmem:[%s519 + $0x4] sm:$0x1] %vm1691, %v1687
        %1697 = vst.msk [vmem:[%s519 + $0x5] sm:$0x1] %vm1691, %v1688
        %1698 = vst.msk [vmem:[%s519 + $0x6] sm:$0x1] %vm1691, %v1689
        %1699 = vst.msk [vmem:[%s519 + $0x7] sm:$0x1] %vm1691, %v1690
        %s1700 = sand.u32 %s240, 1
        %s1701 = scalar_lea.sflag [#allocation7], %s1700
        %s1702 = sand.u32 %s240, 1
        %s1703 = smul.addr %s1702, 8
        %s1704 = scalar_lea.vmem [#allocation14], %s1703
        %s1705 = sand.u32 %s266, 1
        %s1706 = scalar_lea.sflag [#allocation16], %s1705
        %s1707 = sand.u32 %s266, 1
        %s1708 = smul.addr %s1707, 8
        %s1709 = scalar_lea.vmem [#allocation15], %s1708
        // Predicated region
        $region73: #{tpu_custom_call.1} parent=51 // pred_check
          %p1710 = pneg %p250
        $region74: #{tpu_custom_call.1} parent=51 // pred_check_branch
          %1712 = sbr.rel (%p1710) target = $region76
        $region75: #{tpu_custom_call.1} parent=51 // pred_region
          %s1713 = smul.u32 8, %s39
          %s1715 = ssub.s32 128, 128
          %1716 = vsyncadd %s1701, %s1715
          %s1717 = smul.addr %s1713, 16
          %s1718 = scalar_lea.hbm %s8, %s1717
          %s1719 = sshll.u32 %s1704, 4
          %s1720 = int_to_ptr.vmem [resolvable:$true] %s1719
          %1725 = dma.vmem_to_hbm [thread:$0]  %s1720, 128, %s1718, %s1701, 16, 16, 1
        $region76: #{tpu_custom_call.1} parent=51 // pred_fallthru
          _
        // Predicated region
        $region77: #{tpu_custom_call.1} parent=51 // pred_check
          %p1726 = pneg %p276
        $region78: #{tpu_custom_call.1} parent=51 // pred_check_branch
          %1728 = sbr.rel (%p1726) target = $region80
        $region79: #{tpu_custom_call.1} parent=51 // pred_region
          %s1729 = smul.u32 8, %s39
          %s1731 = ssub.s32 128, 128
          %1732 = vsyncadd %s1706, %s1731
          %s1733 = smul.addr %s1729, 16
          %s1734 = scalar_lea.hbm %s9, %s1733
          %s1735 = sshll.u32 %s1709, 4
          %s1736 = int_to_ptr.vmem [resolvable:$true] %s1735
          %1741 = dma.vmem_to_hbm [thread:$0]  %s1736, 128, %s1734, %s1706, 16, 16, 1
        $region80: #{tpu_custom_call.1} parent=51 // pred_fallthru
          _
      $region52: #{tpu_custom_call.1} parent=5 // pred_fallthru
        _
      %p1742 = scmp.le.s32.totalorder 2, %s34
      // Predicated region
      $region81: #{tpu_custom_call.1} parent=5 // pred_check
        %p1743 = pneg %p1742
      $region82: #{tpu_custom_call.1} parent=5 // pred_check_branch
        %1745 = sbr.rel (%p1743) target = $region84
      $region83: #{tpu_custom_call.1} parent=5 // pred_region
        %s1746 = ssub.s32 %s34, 2
        // Predicated region
        $region85: #{tpu_custom_call.1} parent=83 // pred_check
          %p1747 = pneg %p256
        $region86: #{tpu_custom_call.1} parent=83 // pred_check_branch
          %1749 = sbr.rel (%p1747) target = $region88
        $region87: #{tpu_custom_call.1} parent=83 // pred_region
          %s1750 = sand.u32 %s241, 1
          %s1751 = scalar_lea.sflag [#allocation7], %s1750
          %s1752 = sand.u32 %s241, 1
          %s1753 = smul.addr %s1752, 8
          %s1754 = scalar_lea.vmem [#allocation14], %s1753
          %1755 = dma.done %s1751, 128
        $region88: #{tpu_custom_call.1} parent=83 // pred_fallthru
          _
        // Predicated region
        $region89: #{tpu_custom_call.1} parent=83 // pred_check
          %p1756 = pneg %p282
        $region90: #{tpu_custom_call.1} parent=83 // pred_check_branch
          %1758 = sbr.rel (%p1756) target = $region92
        $region91: #{tpu_custom_call.1} parent=83 // pred_region
          %s1759 = sand.u32 %s267, 1
          %s1760 = scalar_lea.sflag [#allocation16], %s1759
          %s1761 = sand.u32 %s267, 1
          %s1762 = smul.addr %s1761, 8
          %s1763 = scalar_lea.vmem [#allocation15], %s1762
          %1764 = dma.done %s1760, 128
        $region92: #{tpu_custom_call.1} parent=83 // pred_fallthru
          _
      $region84: #{tpu_custom_call.1} parent=5 // pred_fallthru
        _
    $region6: #{tpu_custom_call.1} parent=1 // loop_footer
      %s38 = sadd.s32 1, %s34
    $region7: #{tpu_custom_call.1} parent=1 // loop_footer_branch
      %33 = sbr.rel target = $region3
    $region8: #{tpu_custom_call.1} parent=1 // loop_exit
      _
    %1765 = vsyncpa [#allocation6], 1
    %s1766 = scalar_lea.sflag [#allocation6], 1
    %1767 = vsyncpa %s1766, 1
    %1768 = vsyncpa [#allocation9], 1
    %s1769 = scalar_lea.sflag [#allocation9], 1
    %1770 = vsyncpa %s1769, 1
    %1771 = vsyncpa [#allocation12], 1
    %s1772 = scalar_lea.sflag [#allocation12], 1
    %1773 = vsyncpa %s1772, 1
    %1774 = vsyncpa [#allocation7], 1
    %s1775 = scalar_lea.sflag [#allocation7], 1
    %1776 = vsyncpa %s1775, 1
    %1777 = vsyncpa [#allocation16], 1
    %s1778 = scalar_lea.sflag [#allocation16], 1
    %1779 = vsyncpa %s1778, 1

</llo_original>
